<compile_context>
chip_gen: v5e
topology: v5e:2x2
jax: 0.10.0
libtpu: 0.0.40
codegen_flags: <defaults>
</compile_context>

<pallas_src>
import functools

import jax
import jax.numpy as jnp
from jax.experimental import pallas as pl
from jax.experimental.pallas import tpu as pltpu


def _prelu_conv2d_kernel(x_ref, w_ref, shift_ref, alpha_ref, o_ref, *,
                         N, KH, KW, Cin, Cout, Ho, Wp):
    """Single-step kernel over the whole (small) batch.  Channels-first, lane-dense.

    x_ref     : (N, Cin, Hp_ext*Wp)  bf16  zero-padded input, spatially flattened
    w_ref     : (KH*KW, Cout, Cin)   bf16  BN-scale-folded per-tap conv weights
    shift_ref : (Cout, 1)            f32   folded BN shift = beta - mean * scale
    alpha_ref : (1,)                 f32   PReLU slope (SMEM scalar)
    o_ref     : (N, Cout, Ho*Wp)     f32   wide output; columns x >= Wo are garbage and
                                           are sliced off in the wrapper.
    """
    LW = Ho * Wp
    alpha = alpha_ref[0]
    # BN shift seeds the accumulator (hoisted broadcast; no epilogue add).
    shift_wide = jnp.broadcast_to(shift_ref[...], (Cout, LW)).astype(jnp.float32)

    for b in range(N):
        acc = shift_wide
        # KH*KW accumulating MXU matmuls.  For tap (kh, kw) the flattened padded image
        # shifted by kh*Wp + kw lines up with wide output position y*Wp + x, so each tap
        # operand is a contiguous lane slice ("wide" im2col without materializing it).
        for kh in range(KH):
            for kw in range(KW):
                t = kh * KW + kw
                off = kh * Wp + kw
                acc = acc + jnp.dot(w_ref[t], x_ref[b, :, off:off + LW],
                                    preferred_element_type=jnp.float32)
        # PReLU epilogue.
        o_ref[b] = jnp.where(acc >= 0, acc, alpha * acc).astype(o_ref.dtype)


def prelu_conv2d(x_nchw, w_oihw, gamma, beta, running_mean, running_var, alpha,
                 *, padding=1, eps=1e-3):
    """Conv2d(bias=False, stride=1, dilation=1) + BatchNorm2d(eval) + PReLU.

    NCHW in / NCHW out, matching the PyTorch module's forward.
    Only the FastARCNN configuration (stride=1, dilation=1, groups=1) is supported; the
    interface exposes no stride/dilation args so misuse cannot silently produce wrong
    output.
    """
    N, Cin, H, W = x_nchw.shape
    Cout, Cin_w, KH, KW = w_oihw.shape
    assert Cin == Cin_w, (Cin, Cin_w)

    Ho = H + 2 * padding - KH + 1   # stride 1
    Wo = W + 2 * padding - KW + 1
    assert Ho > 0 and Wo > 0, (Ho, Wo)
    Hp = H + 2 * padding
    Wp = W + 2 * padding
    # Extra zero rows at the bottom so the widest tap's wide lane slice stays in bounds
    # (the extra reads only feed garbage columns that the wrapper drops).
    need = (KH - 1) * Wp + (KW - 1) + Ho * Wp
    Hp_ext = max(Hp, pl.cdiv(need, Wp))

    # ---- host-side prep (no layout transposes of the activation tensor) ---------------
    # BatchNorm (inference) folding: scale into the weights, shift kept separate.
    scale = (gamma / jnp.sqrt(running_var.astype(jnp.float32) + eps)).astype(jnp.float32)
    shift = (beta - running_mean * scale).astype(jnp.float32).reshape(Cout, 1)

    w_scaled = w_oihw.astype(jnp.float32) * scale[:, None, None, None]
    # Per-tap (Cout, Cin) matrices in (kh, kw) tap-major order, bf16 for the MXU.
    w_taps = jnp.transpose(w_scaled, (2, 3, 0, 1)).reshape(KH * KW, Cout, Cin)
    w_taps = w_taps.astype(jnp.bfloat16)

    # bf16 *before* padding halves the pad pass's HBM traffic.
    # TODO(synk): move padding into the kernel (mask edge taps) to drop this pass.
    x_bf16 = x_nchw.astype(jnp.bfloat16)
    x_pad = jnp.pad(x_bf16, ((0, 0), (0, 0),
                             (padding, padding + (Hp_ext - Hp)),
                             (padding, padding)))
    x_flat = x_pad.reshape(N, Cin, Hp_ext * Wp)

    alpha1 = jnp.asarray(alpha, jnp.float32).reshape(1)

    kernel = functools.partial(_prelu_conv2d_kernel, N=N, KH=KH, KW=KW, Cin=Cin,
                               Cout=Cout, Ho=Ho, Wp=Wp)

    flops = 2 * N * Cout * Ho * Wo * KH * KW * Cin
    bytes_accessed = (x_flat.size * 2 + w_taps.size * 2 + shift.size * 4 + 4
                      + N * Cout * Ho * Wp * 4)

    out_wide = pl.pallas_call(
        kernel,
        out_shape=jax.ShapeDtypeStruct((N, Cout, Ho * Wp), jnp.float32),
        in_specs=[
            pl.BlockSpec(memory_space=pltpu.MemorySpace.VMEM),   # x (whole batch)
            pl.BlockSpec(memory_space=pltpu.MemorySpace.VMEM),   # per-tap weights
            pl.BlockSpec(memory_space=pltpu.MemorySpace.VMEM),   # folded BN shift
            pl.BlockSpec(memory_space=pltpu.MemorySpace.SMEM),   # PReLU alpha scalar
        ],
        out_specs=pl.BlockSpec(memory_space=pltpu.MemorySpace.VMEM),
        cost_estimate=pl.CostEstimate(flops=flops, transcendentals=0,
                                      bytes_accessed=bytes_accessed),
    )(x_flat, w_taps, shift, alpha1)

    # Drop the garbage columns (x >= Wo): tiny XLA slice that fuses with the consumer.
    return out_wide.reshape(N, Cout, Ho, Wp)[:, :, :, :Wo]


def _reference(x_nchw, w_oihw, gamma, beta, running_mean, running_var, alpha,
               *, padding=1, eps=1e-3, conv_dtype=jnp.float32):
    """Pure-JAX reference.  conv_dtype=bfloat16 mirrors the kernel's MXU precision."""
    scale = gamma / jnp.sqrt(running_var + eps)
    shift = beta - running_mean * scale
    w_s = (w_oihw.astype(jnp.float32) * scale[:, None, None, None]).astype(conv_dtype)
    y = jax.lax.conv_general_dilated(
        x_nchw.astype(conv_dtype), w_s,
        window_strides=(1, 1),
        padding=[(padding, padding), (padding, padding)],
        dimension_numbers=("NCHW", "OIHW", "NCHW"),
        preferred_element_type=jnp.float32)
    y = y + shift[None, :, None, None]
    return jnp.where(y >= 0, y, alpha * y)


if __name__ == "__main__":
    key = jax.random.PRNGKey(0)
    k_x, k_w, k_g, k_b, k_m, k_v = jax.random.split(key, 6)

    N, Cin, Cout, H, W, K = 2, 4, 8, 16, 16, 3

    x = jax.random.normal(k_x, (N, Cin, H, W), jnp.float32)
    w = jax.random.normal(k_w, (Cout, Cin, K, K), jnp.float32) * 0.1
    gamma = 1.0 + 0.1 * jax.random.normal(k_g, (Cout,), jnp.float32)
    beta = 0.1 * jax.random.normal(k_b, (Cout,), jnp.float32)
    running_mean = 0.1 * jax.random.normal(k_m, (Cout,), jnp.float32)
    running_var = jnp.abs(jax.random.normal(k_v, (Cout,), jnp.float32)) + 0.5
    alpha = jnp.float32(0.25)  # PyTorch PReLU default init

    out = prelu_conv2d(x, w, gamma, beta, running_mean, running_var, alpha,
                       padding=1, eps=1e-3)
    out = jax.block_until_ready(out)
    assert out.shape == (N, Cout, H, W), out.shape

    # Precision-matched reference (bf16 MXU inputs, f32 accumulation): tight check that
    # validates the wide-tap indexing / BN folding / PReLU exactly.
    ref_bf16 = _reference(x, w, gamma, beta, running_mean, running_var, alpha,
                          padding=1, eps=1e-3, conv_dtype=jnp.bfloat16)
    assert jnp.allclose(out, ref_bf16, atol=2e-3, rtol=2e-3), \
        float(jnp.max(jnp.abs(out - ref_bf16)))

    # Full-f32 reference: looser tolerance because the MXU inputs are bf16 (f32 accumulate).
    # TODO(synk): bf16 MXU inputs deviate from PyTorch's f32 conv numerics; switch the
    # kernel inputs to f32 if bit-level parity with the PyTorch module matters.
    ref_f32 = _reference(x, w, gamma, beta, running_mean, running_var, alpha,
                         padding=1, eps=1e-3, conv_dtype=jnp.float32)
    assert jnp.allclose(out, ref_f32, atol=1e-1, rtol=5e-2), \
        float(jnp.max(jnp.abs(out - ref_f32)))

    print("KERNEL_OK")
</pallas_src>

<mosaic_0001>
module attributes {stable_mosaic.version = 11 : i64} {
  func.func @_prelu_conv2d_kernel(%arg0: memref<2x4x342xbf16, #tpu.memory_space<vmem>>, %arg1: memref<9x8x4xbf16, #tpu.memory_space<vmem>>, %arg2: memref<8x1xf32, #tpu.memory_space<vmem>>, %arg3: memref<1xf32, #tpu.memory_space<smem>>, %arg4: memref<2x8x288xf32, #tpu.memory_space<vmem>>) attributes {dimension_semantics = [], scalar_prefetch = 0 : i64, scratch_operands = 0 : i64, tpu.core_type = #tpu.core_type<tc>} {
    %c0 = arith.constant 0 : index
    %0 = memref.load %arg3[%c0] : memref<1xf32, #tpu.memory_space<smem>>
    %c0_0 = arith.constant 0 : index
    %c0_1 = arith.constant 0 : index
    %1 = vector.load %arg2[%c0_0, %c0_1] : memref<8x1xf32, #tpu.memory_space<vmem>>, vector<8x1xf32>
    %2 = vector.shape_cast %1 : vector<8x1xf32> to vector<8x1xf32>
    %3 = vector.broadcast %2 : vector<8x1xf32> to vector<8x288xf32>
    %c0_2 = arith.constant 0 : index
    %c0_3 = arith.constant 0 : index
    %c0_4 = arith.constant 0 : index
    %4 = vector.load %arg1[%c0_2, %c0_3, %c0_4] : memref<9x8x4xbf16, #tpu.memory_space<vmem>>, vector<1x8x4xbf16>
    %5 = vector.shape_cast %4 : vector<1x8x4xbf16> to vector<8x4xbf16>
    %c0_5 = arith.constant 0 : index
    %c0_6 = arith.constant 0 : index
    %c0_7 = arith.constant 0 : index
    %6 = vector.load %arg0[%c0_5, %c0_6, %c0_7] : memref<2x4x342xbf16, #tpu.memory_space<vmem>>, vector<1x4x288xbf16>
    %7 = vector.shape_cast %6 : vector<1x4x288xbf16> to vector<4x288xbf16>
    %cst = arith.constant dense<0.000000e+00> : vector<8x288xf32>
    %8 = tpu.matmul %5, %7, %cst {dimension_numbers = #tpu.dot_dimension_numbers<[1], [0], [0], [1], [0, 0, 1, 1], [], []>} : vector<8x4xbf16>, vector<4x288xbf16>, vector<8x288xf32> -> vector<8x288xf32>
    %9 = arith.addf %3, %8 : vector<8x288xf32>
    %c1 = arith.constant 1 : index
    %c0_8 = arith.constant 0 : index
    %c0_9 = arith.constant 0 : index
    %10 = vector.load %arg1[%c1, %c0_8, %c0_9] : memref<9x8x4xbf16, #tpu.memory_space<vmem>>, vector<1x8x4xbf16>
    %11 = vector.shape_cast %10 : vector<1x8x4xbf16> to vector<8x4xbf16>
    %c0_10 = arith.constant 0 : index
    %c0_11 = arith.constant 0 : index
    %c1_12 = arith.constant 1 : index
    %12 = vector.load %arg0[%c0_10, %c0_11, %c1_12] : memref<2x4x342xbf16, #tpu.memory_space<vmem>>, vector<1x4x288xbf16>
    %13 = vector.shape_cast %12 : vector<1x4x288xbf16> to vector<4x288xbf16>
    %cst_13 = arith.constant dense<0.000000e+00> : vector<8x288xf32>
    %14 = tpu.matmul %11, %13, %cst_13 {dimension_numbers = #tpu.dot_dimension_numbers<[1], [0], [0], [1], [0, 0, 1, 1], [], []>} : vector<8x4xbf16>, vector<4x288xbf16>, vector<8x288xf32> -> vector<8x288xf32>
    %15 = arith.addf %9, %14 : vector<8x288xf32>
    %c2 = arith.constant 2 : index
    %c0_14 = arith.constant 0 : index
    %c0_15 = arith.constant 0 : index
    %16 = vector.load %arg1[%c2, %c0_14, %c0_15] : memref<9x8x4xbf16, #tpu.memory_space<vmem>>, vector<1x8x4xbf16>
    %17 = vector.shape_cast %16 : vector<1x8x4xbf16> to vector<8x4xbf16>
    %c0_16 = arith.constant 0 : index
    %c0_17 = arith.constant 0 : index
    %c2_18 = arith.constant 2 : index
    %18 = vector.load %arg0[%c0_16, %c0_17, %c2_18] : memref<2x4x342xbf16, #tpu.memory_space<vmem>>, vector<1x4x288xbf16>
    %19 = vector.shape_cast %18 : vector<1x4x288xbf16> to vector<4x288xbf16>
    %cst_19 = arith.constant dense<0.000000e+00> : vector<8x288xf32>
    %20 = tpu.matmul %17, %19, %cst_19 {dimension_numbers = #tpu.dot_dimension_numbers<[1], [0], [0], [1], [0, 0, 1, 1], [], []>} : vector<8x4xbf16>, vector<4x288xbf16>, vector<8x288xf32> -> vector<8x288xf32>
    %21 = arith.addf %15, %20 : vector<8x288xf32>
    %c3 = arith.constant 3 : index
    %c0_20 = arith.constant 0 : index
    %c0_21 = arith.constant 0 : index
    %22 = vector.load %arg1[%c3, %c0_20, %c0_21] : memref<9x8x4xbf16, #tpu.memory_space<vmem>>, vector<1x8x4xbf16>
    %23 = vector.shape_cast %22 : vector<1x8x4xbf16> to vector<8x4xbf16>
    %c0_22 = arith.constant 0 : index
    %c0_23 = arith.constant 0 : index
    %c18 = arith.constant 18 : index
    %24 = vector.load %arg0[%c0_22, %c0_23, %c18] : memref<2x4x342xbf16, #tpu.memory_space<vmem>>, vector<1x4x288xbf16>
    %25 = vector.shape_cast %24 : vector<1x4x288xbf16> to vector<4x288xbf16>
    %cst_24 = arith.constant dense<0.000000e+00> : vector<8x288xf32>
    %26 = tpu.matmul %23, %25, %cst_24 {dimension_numbers = #tpu.dot_dimension_numbers<[1], [0], [0], [1], [0, 0, 1, 1], [], []>} : vector<8x4xbf16>, vector<4x288xbf16>, vector<8x288xf32> -> vector<8x288xf32>
    %27 = arith.addf %21, %26 : vector<8x288xf32>
    %c4 = arith.constant 4 : index
    %c0_25 = arith.constant 0 : index
    %c0_26 = arith.constant 0 : index
    %28 = vector.load %arg1[%c4, %c0_25, %c0_26] : memref<9x8x4xbf16, #tpu.memory_space<vmem>>, vector<1x8x4xbf16>
    %29 = vector.shape_cast %28 : vector<1x8x4xbf16> to vector<8x4xbf16>
    %c0_27 = arith.constant 0 : index
    %c0_28 = arith.constant 0 : index
    %c19 = arith.constant 19 : index
    %30 = vector.load %arg0[%c0_27, %c0_28, %c19] : memref<2x4x342xbf16, #tpu.memory_space<vmem>>, vector<1x4x288xbf16>
    %31 = vector.shape_cast %30 : vector<1x4x288xbf16> to vector<4x288xbf16>
    %cst_29 = arith.constant dense<0.000000e+00> : vector<8x288xf32>
    %32 = tpu.matmul %29, %31, %cst_29 {dimension_numbers = #tpu.dot_dimension_numbers<[1], [0], [0], [1], [0, 0, 1, 1], [], []>} : vector<8x4xbf16>, vector<4x288xbf16>, vector<8x288xf32> -> vector<8x288xf32>
    %33 = arith.addf %27, %32 : vector<8x288xf32>
    %c5 = arith.constant 5 : index
    %c0_30 = arith.constant 0 : index
    %c0_31 = arith.constant 0 : index
    %34 = vector.load %arg1[%c5, %c0_30, %c0_31] : memref<9x8x4xbf16, #tpu.memory_space<vmem>>, vector<1x8x4xbf16>
    %35 = vector.shape_cast %34 : vector<1x8x4xbf16> to vector<8x4xbf16>
    %c0_32 = arith.constant 0 : index
    %c0_33 = arith.constant 0 : index
    %c20 = arith.constant 20 : index
    %36 = vector.load %arg0[%c0_32, %c0_33, %c20] : memref<2x4x342xbf16, #tpu.memory_space<vmem>>, vector<1x4x288xbf16>
    %37 = vector.shape_cast %36 : vector<1x4x288xbf16> to vector<4x288xbf16>
    %cst_34 = arith.constant dense<0.000000e+00> : vector<8x288xf32>
    %38 = tpu.matmul %35, %37, %cst_34 {dimension_numbers = #tpu.dot_dimension_numbers<[1], [0], [0], [1], [0, 0, 1, 1], [], []>} : vector<8x4xbf16>, vector<4x288xbf16>, vector<8x288xf32> -> vector<8x288xf32>
    %39 = arith.addf %33, %38 : vector<8x288xf32>
    %c6 = arith.constant 6 : index
    %c0_35 = arith.constant 0 : index
    %c0_36 = arith.constant 0 : index
    %40 = vector.load %arg1[%c6, %c0_35, %c0_36] : memref<9x8x4xbf16, #tpu.memory_space<vmem>>, vector<1x8x4xbf16>
    %41 = vector.shape_cast %40 : vector<1x8x4xbf16> to vector<8x4xbf16>
    %c0_37 = arith.constant 0 : index
    %c0_38 = arith.constant 0 : index
    %c36 = arith.constant 36 : index
    %42 = vector.load %arg0[%c0_37, %c0_38, %c36] : memref<2x4x342xbf16, #tpu.memory_space<vmem>>, vector<1x4x288xbf16>
    %43 = vector.shape_cast %42 : vector<1x4x288xbf16> to vector<4x288xbf16>
    %cst_39 = arith.constant dense<0.000000e+00> : vector<8x288xf32>
    %44 = tpu.matmul %41, %43, %cst_39 {dimension_numbers = #tpu.dot_dimension_numbers<[1], [0], [0], [1], [0, 0, 1, 1], [], []>} : vector<8x4xbf16>, vector<4x288xbf16>, vector<8x288xf32> -> vector<8x288xf32>
    %45 = arith.addf %39, %44 : vector<8x288xf32>
    %c7 = arith.constant 7 : index
    %c0_40 = arith.constant 0 : index
    %c0_41 = arith.constant 0 : index
    %46 = vector.load %arg1[%c7, %c0_40, %c0_41] : memref<9x8x4xbf16, #tpu.memory_space<vmem>>, vector<1x8x4xbf16>
    %47 = vector.shape_cast %46 : vector<1x8x4xbf16> to vector<8x4xbf16>
    %c0_42 = arith.constant 0 : index
    %c0_43 = arith.constant 0 : index
    %c37 = arith.constant 37 : index
    %48 = vector.load %arg0[%c0_42, %c0_43, %c37] : memref<2x4x342xbf16, #tpu.memory_space<vmem>>, vector<1x4x288xbf16>
    %49 = vector.shape_cast %48 : vector<1x4x288xbf16> to vector<4x288xbf16>
    %cst_44 = arith.constant dense<0.000000e+00> : vector<8x288xf32>
    %50 = tpu.matmul %47, %49, %cst_44 {dimension_numbers = #tpu.dot_dimension_numbers<[1], [0], [0], [1], [0, 0, 1, 1], [], []>} : vector<8x4xbf16>, vector<4x288xbf16>, vector<8x288xf32> -> vector<8x288xf32>
    %51 = arith.addf %45, %50 : vector<8x288xf32>
    %c8 = arith.constant 8 : index
    %c0_45 = arith.constant 0 : index
    %c0_46 = arith.constant 0 : index
    %52 = vector.load %arg1[%c8, %c0_45, %c0_46] : memref<9x8x4xbf16, #tpu.memory_space<vmem>>, vector<1x8x4xbf16>
    %53 = vector.shape_cast %52 : vector<1x8x4xbf16> to vector<8x4xbf16>
    %c0_47 = arith.constant 0 : index
    %c0_48 = arith.constant 0 : index
    %c38 = arith.constant 38 : index
    %54 = vector.load %arg0[%c0_47, %c0_48, %c38] : memref<2x4x342xbf16, #tpu.memory_space<vmem>>, vector<1x4x288xbf16>
    %55 = vector.shape_cast %54 : vector<1x4x288xbf16> to vector<4x288xbf16>
    %cst_49 = arith.constant dense<0.000000e+00> : vector<8x288xf32>
    %56 = tpu.matmul %53, %55, %cst_49 {dimension_numbers = #tpu.dot_dimension_numbers<[1], [0], [0], [1], [0, 0, 1, 1], [], []>} : vector<8x4xbf16>, vector<4x288xbf16>, vector<8x288xf32> -> vector<8x288xf32>
    %57 = arith.addf %51, %56 : vector<8x288xf32>
    %cst_50 = arith.constant 0.000000e+00 : f32
    %58 = vector.broadcast %cst_50 : f32 to vector<8x288xf32>
    %59 = arith.cmpf oge, %57, %58 : vector<8x288xf32>
    %60 = vector.broadcast %0 : f32 to vector<8x288xf32>
    %61 = arith.mulf %60, %57 : vector<8x288xf32>
    %62 = arith.select %59, %57, %61 : vector<8x288xi1>, vector<8x288xf32>
    %c0_51 = arith.constant 0 : index
    %c0_52 = arith.constant 0 : index
    %c0_53 = arith.constant 0 : index
    %63 = vector.load %arg4[%c0_51, %c0_52, %c0_53] : memref<2x8x288xf32, #tpu.memory_space<vmem>>, vector<1x8x288xf32>
    %64 = vector.shape_cast %63 : vector<1x8x288xf32> to vector<8x288xf32>
    %65 = vector.shape_cast %62 : vector<8x288xf32> to vector<1x8x288xf32>
    tpu.vector_store %arg4[%c0_51, %c0_52, %c0_53], %65 {strides = array<i32>} : memref<2x8x288xf32, #tpu.memory_space<vmem>>, vector<1x8x288xf32>,
    %c0_54 = arith.constant 0 : index
    %c0_55 = arith.constant 0 : index
    %c0_56 = arith.constant 0 : index
    %66 = vector.load %arg1[%c0_54, %c0_55, %c0_56] : memref<9x8x4xbf16, #tpu.memory_space<vmem>>, vector<1x8x4xbf16>
    %67 = vector.shape_cast %66 : vector<1x8x4xbf16> to vector<8x4xbf16>
    %c1_57 = arith.constant 1 : index
    %c0_58 = arith.constant 0 : index
    %c0_59 = arith.constant 0 : index
    %68 = vector.load %arg0[%c1_57, %c0_58, %c0_59] : memref<2x4x342xbf16, #tpu.memory_space<vmem>>, vector<1x4x288xbf16>
    %69 = vector.shape_cast %68 : vector<1x4x288xbf16> to vector<4x288xbf16>
    %cst_60 = arith.constant dense<0.000000e+00> : vector<8x288xf32>
    %70 = tpu.matmul %67, %69, %cst_60 {dimension_numbers = #tpu.dot_dimension_numbers<[1], [0], [0], [1], [0, 0, 1, 1], [], []>} : vector<8x4xbf16>, vector<4x288xbf16>, vector<8x288xf32> -> vector<8x288xf32>
    %71 = arith.addf %3, %70 : vector<8x288xf32>
    %c1_61 = arith.constant 1 : index
    %c0_62 = arith.constant 0 : index
    %c0_63 = arith.constant 0 : index
    %72 = vector.load %arg1[%c1_61, %c0_62, %c0_63] : memref<9x8x4xbf16, #tpu.memory_space<vmem>>, vector<1x8x4xbf16>
    %73 = vector.shape_cast %72 : vector<1x8x4xbf16> to vector<8x4xbf16>
    %c1_64 = arith.constant 1 : index
    %c0_65 = arith.constant 0 : index
    %c1_66 = arith.constant 1 : index
    %74 = vector.load %arg0[%c1_64, %c0_65, %c1_66] : memref<2x4x342xbf16, #tpu.memory_space<vmem>>, vector<1x4x288xbf16>
    %75 = vector.shape_cast %74 : vector<1x4x288xbf16> to vector<4x288xbf16>
    %cst_67 = arith.constant dense<0.000000e+00> : vector<8x288xf32>
    %76 = tpu.matmul %73, %75, %cst_67 {dimension_numbers = #tpu.dot_dimension_numbers<[1], [0], [0], [1], [0, 0, 1, 1], [], []>} : vector<8x4xbf16>, vector<4x288xbf16>, vector<8x288xf32> -> vector<8x288xf32>
    %77 = arith.addf %71, %76 : vector<8x288xf32>
    %c2_68 = arith.constant 2 : index
    %c0_69 = arith.constant 0 : index
    %c0_70 = arith.constant 0 : index
    %78 = vector.load %arg1[%c2_68, %c0_69, %c0_70] : memref<9x8x4xbf16, #tpu.memory_space<vmem>>, vector<1x8x4xbf16>
    %79 = vector.shape_cast %78 : vector<1x8x4xbf16> to vector<8x4xbf16>
    %c1_71 = arith.constant 1 : index
    %c0_72 = arith.constant 0 : index
    %c2_73 = arith.constant 2 : index
    %80 = vector.load %arg0[%c1_71, %c0_72, %c2_73] : memref<2x4x342xbf16, #tpu.memory_space<vmem>>, vector<1x4x288xbf16>
    %81 = vector.shape_cast %80 : vector<1x4x288xbf16> to vector<4x288xbf16>
    %cst_74 = arith.constant dense<0.000000e+00> : vector<8x288xf32>
    %82 = tpu.matmul %79, %81, %cst_74 {dimension_numbers = #tpu.dot_dimension_numbers<[1], [0], [0], [1], [0, 0, 1, 1], [], []>} : vector<8x4xbf16>, vector<4x288xbf16>, vector<8x288xf32> -> vector<8x288xf32>
    %83 = arith.addf %77, %82 : vector<8x288xf32>
    %c3_75 = arith.constant 3 : index
    %c0_76 = arith.constant 0 : index
    %c0_77 = arith.constant 0 : index
    %84 = vector.load %arg1[%c3_75, %c0_76, %c0_77] : memref<9x8x4xbf16, #tpu.memory_space<vmem>>, vector<1x8x4xbf16>
    %85 = vector.shape_cast %84 : vector<1x8x4xbf16> to vector<8x4xbf16>
    %c1_78 = arith.constant 1 : index
    %c0_79 = arith.constant 0 : index
    %c18_80 = arith.constant 18 : index
    %86 = vector.load %arg0[%c1_78, %c0_79, %c18_80] : memref<2x4x342xbf16, #tpu.memory_space<vmem>>, vector<1x4x288xbf16>
    %87 = vector.shape_cast %86 : vector<1x4x288xbf16> to vector<4x288xbf16>
    %cst_81 = arith.constant dense<0.000000e+00> : vector<8x288xf32>
    %88 = tpu.matmul %85, %87, %cst_81 {dimension_numbers = #tpu.dot_dimension_numbers<[1], [0], [0], [1], [0, 0, 1, 1], [], []>} : vector<8x4xbf16>, vector<4x288xbf16>, vector<8x288xf32> -> vector<8x288xf32>
    %89 = arith.addf %83, %88 : vector<8x288xf32>
    %c4_82 = arith.constant 4 : index
    %c0_83 = arith.constant 0 : index
    %c0_84 = arith.constant 0 : index
    %90 = vector.load %arg1[%c4_82, %c0_83, %c0_84] : memref<9x8x4xbf16, #tpu.memory_space<vmem>>, vector<1x8x4xbf16>
    %91 = vector.shape_cast %90 : vector<1x8x4xbf16> to vector<8x4xbf16>
    %c1_85 = arith.constant 1 : index
    %c0_86 = arith.constant 0 : index
    %c19_87 = arith.constant 19 : index
    %92 = vector.load %arg0[%c1_85, %c0_86, %c19_87] : memref<2x4x342xbf16, #tpu.memory_space<vmem>>, vector<1x4x288xbf16>
    %93 = vector.shape_cast %92 : vector<1x4x288xbf16> to vector<4x288xbf16>
    %cst_88 = arith.constant dense<0.000000e+00> : vector<8x288xf32>
    %94 = tpu.matmul %91, %93, %cst_88 {dimension_numbers = #tpu.dot_dimension_numbers<[1], [0], [0], [1], [0, 0, 1, 1], [], []>} : vector<8x4xbf16>, vector<4x288xbf16>, vector<8x288xf32> -> vector<8x288xf32>
    %95 = arith.addf %89, %94 : vector<8x288xf32>
    %c5_89 = arith.constant 5 : index
    %c0_90 = arith.constant 0 : index
    %c0_91 = arith.constant 0 : index
    %96 = vector.load %arg1[%c5_89, %c0_90, %c0_91] : memref<9x8x4xbf16, #tpu.memory_space<vmem>>, vector<1x8x4xbf16>
    %97 = vector.shape_cast %96 : vector<1x8x4xbf16> to vector<8x4xbf16>
    %c1_92 = arith.constant 1 : index
    %c0_93 = arith.constant 0 : index
    %c20_94 = arith.constant 20 : index
    %98 = vector.load %arg0[%c1_92, %c0_93, %c20_94] : memref<2x4x342xbf16, #tpu.memory_space<vmem>>, vector<1x4x288xbf16>
    %99 = vector.shape_cast %98 : vector<1x4x288xbf16> to vector<4x288xbf16>
    %cst_95 = arith.constant dense<0.000000e+00> : vector<8x288xf32>
    %100 = tpu.matmul %97, %99, %cst_95 {dimension_numbers = #tpu.dot_dimension_numbers<[1], [0], [0], [1], [0, 0, 1, 1], [], []>} : vector<8x4xbf16>, vector<4x288xbf16>, vector<8x288xf32> -> vector<8x288xf32>
    %101 = arith.addf %95, %100 : vector<8x288xf32>
    %c6_96 = arith.constant 6 : index
    %c0_97 = arith.constant 0 : index
    %c0_98 = arith.constant 0 : index
    %102 = vector.load %arg1[%c6_96, %c0_97, %c0_98] : memref<9x8x4xbf16, #tpu.memory_space<vmem>>, vector<1x8x4xbf16>
    %103 = vector.shape_cast %102 : vector<1x8x4xbf16> to vector<8x4xbf16>
    %c1_99 = arith.constant 1 : index
    %c0_100 = arith.constant 0 : index
    %c36_101 = arith.constant 36 : index
    %104 = vector.load %arg0[%c1_99, %c0_100, %c36_101] : memref<2x4x342xbf16, #tpu.memory_space<vmem>>, vector<1x4x288xbf16>
    %105 = vector.shape_cast %104 : vector<1x4x288xbf16> to vector<4x288xbf16>
    %cst_102 = arith.constant dense<0.000000e+00> : vector<8x288xf32>
    %106 = tpu.matmul %103, %105, %cst_102 {dimension_numbers = #tpu.dot_dimension_numbers<[1], [0], [0], [1], [0, 0, 1, 1], [], []>} : vector<8x4xbf16>, vector<4x288xbf16>, vector<8x288xf32> -> vector<8x288xf32>
    %107 = arith.addf %101, %106 : vector<8x288xf32>
    %c7_103 = arith.constant 7 : index
    %c0_104 = arith.constant 0 : index
    %c0_105 = arith.constant 0 : index
    %108 = vector.load %arg1[%c7_103, %c0_104, %c0_105] : memref<9x8x4xbf16, #tpu.memory_space<vmem>>, vector<1x8x4xbf16>
    %109 = vector.shape_cast %108 : vector<1x8x4xbf16> to vector<8x4xbf16>
    %c1_106 = arith.constant 1 : index
    %c0_107 = arith.constant 0 : index
    %c37_108 = arith.constant 37 : index
    %110 = vector.load %arg0[%c1_106, %c0_107, %c37_108] : memref<2x4x342xbf16, #tpu.memory_space<vmem>>, vector<1x4x288xbf16>
    %111 = vector.shape_cast %110 : vector<1x4x288xbf16> to vector<4x288xbf16>
    %cst_109 = arith.constant dense<0.000000e+00> : vector<8x288xf32>
    %112 = tpu.matmul %109, %111, %cst_109 {dimension_numbers = #tpu.dot_dimension_numbers<[1], [0], [0], [1], [0, 0, 1, 1], [], []>} : vector<8x4xbf16>, vector<4x288xbf16>, vector<8x288xf32> -> vector<8x288xf32>
    %113 = arith.addf %107, %112 : vector<8x288xf32>
    %c8_110 = arith.constant 8 : index
    %c0_111 = arith.constant 0 : index
    %c0_112 = arith.constant 0 : index
    %114 = vector.load %arg1[%c8_110, %c0_111, %c0_112] : memref<9x8x4xbf16, #tpu.memory_space<vmem>>, vector<1x8x4xbf16>
    %115 = vector.shape_cast %114 : vector<1x8x4xbf16> to vector<8x4xbf16>
    %c1_113 = arith.constant 1 : index
    %c0_114 = arith.constant 0 : index
    %c38_115 = arith.constant 38 : index
    %116 = vector.load %arg0[%c1_113, %c0_114, %c38_115] : memref<2x4x342xbf16, #tpu.memory_space<vmem>>, vector<1x4x288xbf16>
    %117 = vector.shape_cast %116 : vector<1x4x288xbf16> to vector<4x288xbf16>
    %cst_116 = arith.constant dense<0.000000e+00> : vector<8x288xf32>
    %118 = tpu.matmul %115, %117, %cst_116 {dimension_numbers = #tpu.dot_dimension_numbers<[1], [0], [0], [1], [0, 0, 1, 1], [], []>} : vector<8x4xbf16>, vector<4x288xbf16>, vector<8x288xf32> -> vector<8x288xf32>
    %119 = arith.addf %113, %118 : vector<8x288xf32>
    %cst_117 = arith.constant 0.000000e+00 : f32
    %120 = vector.broadcast %cst_117 : f32 to vector<8x288xf32>
    %121 = arith.cmpf oge, %119, %120 : vector<8x288xf32>
    %122 = vector.broadcast %0 : f32 to vector<8x288xf32>
    %123 = arith.mulf %122, %119 : vector<8x288xf32>
    %124 = arith.select %121, %119, %123 : vector<8x288xi1>, vector<8x288xf32>
    %c1_118 = arith.constant 1 : index
    %c0_119 = arith.constant 0 : index
    %c0_120 = arith.constant 0 : index
    %125 = vector.load %arg4[%c1_118, %c0_119, %c0_120] : memref<2x8x288xf32, #tpu.memory_space<vmem>>, vector<1x8x288xf32>
    %126 = vector.shape_cast %125 : vector<1x8x288xf32> to vector<8x288xf32>
    %127 = vector.shape_cast %124 : vector<8x288xf32> to vector<1x8x288xf32>
    tpu.vector_store %arg4[%c1_118, %c0_119, %c0_120], %127 {strides = array<i32>} : memref<2x8x288xf32, #tpu.memory_space<vmem>>, vector<1x8x288xf32>,
    return
  }
}

</mosaic_0001>

<llo_original>
// kernel: tpu_custom_call.1
$region0: #{tpu_custom_call.1}
  #allocation0 [shape = 'u32[]', space=smem, size = 0x4, offset = 0x4, fixed_abs, tag = 'smem constant byte address 0x4 - core index']
  #allocation1 [shape = 'u32[72,128]{1,0:T(1,128)}', space=vmem, size = 0x9000, scoped, tag = 'internal scratch']
  #allocation2 [shape = 'f32[1]{0:T(128)S(6)}', space=smem, size = 0x200, scoped, tag = 'scoped memory for tpu_custom_call.1']
  %s0 = inlined_call_operand.vmem [shape: bf16[2,4,342], index: 0, kind: input, shape index: {}]
  %s1 = inlined_call_operand.vmem [shape: bf16[9,8,4], index: 1, kind: input, shape index: {}]
  %s2 = inlined_call_operand.vmem [shape: f32[8,1], index: 2, kind: input, shape index: {}]
  %s3 = inlined_call_operand.<no memory space> [shape: f32[1], index: 3, kind: input, shape index: {}]
  %s4 = inlined_call_operand.hbm [shape: f32[2,8,288], index: 4, kind: output, shape index: {}]
  %s5 = sld [smem:[#allocation0]]
  $region26: #{tpu_custom_call.1} parent=0
    _
  %s7 = ssub.s32 1, %s5
  %s8 = scalar_select 0, %s7, %s5
  %9 = sst [smem:[#allocation2]] %s3
  $region1: #{tpu_custom_call.1} parent=0
    #allocation3 [shape = 'u8[24576]{0}', space=vmem, size = 0x6000, scoped, tag = 'output window, operand 0, single buffered']
    #allocation4 [shape = 's32[1]{0}', space=sflag, size = 0x4, scoped, tag = 'scoped memory for tpu_custom_call.1']
    %10 = vsyncpa [#allocation4], 0
    // Predicated region
    $region2: #{tpu_custom_call.1} parent=1 // pred_check
      _
    $region3: #{tpu_custom_call.1} parent=1 // pred_check_branch
      %12 = sbr.rel (0) target = $region5
    $region4: #{tpu_custom_call.1} parent=1 // pred_region
      _
    $region5: #{tpu_custom_call.1} parent=1 // pred_fallthru
      _
    // Predicated region
    $region6: #{tpu_custom_call.1} parent=1 // pred_check
      _
    $region7: #{tpu_custom_call.1} parent=1 // pred_check_branch
      %14 = sbr.rel (0) target = $region9
    $region8: #{tpu_custom_call.1} parent=1 // pred_region
      _
    $region9: #{tpu_custom_call.1} parent=1 // pred_fallthru
      _
    // Predicated region
    $region10: #{tpu_custom_call.1} parent=1 // pred_check
      _
    $region11: #{tpu_custom_call.1} parent=1 // pred_check_branch
      %16 = sbr.rel (0) target = $region13
    $region12: #{tpu_custom_call.1} parent=1 // pred_region
      _
    $region13: #{tpu_custom_call.1} parent=1 // pred_fallthru
      _
    // Predicated region
    $region14: #{tpu_custom_call.1} parent=1 // pred_check
      _
    $region15: #{tpu_custom_call.1} parent=1 // pred_check_branch
      %18 = sbr.rel (0) target = $region17
    $region16: #{tpu_custom_call.1} parent=1 // pred_region
      _
    $region17: #{tpu_custom_call.1} parent=1 // pred_fallthru
      _
    %s20 = sld [smem:[#allocation2]]
    %v21 = vld [vmem:[%s2] sm:$0xff]
    %23 = vset.pattern.permute.xlu0 0
    %24 = vperm.xlu0 %23, %v21
    %v25 = vpop.permute.xlu0 %24
    %v27 = vld [vmem:[%s1] sm:$0xf]
    %v28 = vld [vmem:[%s0] sm:$0x3f]
    %30 = vst [vmem:[#allocation1] ss:$4 sm:$0xff] %v28
    %v31 = vld.sshfl [vmem:[#allocation1] sm:$0xff pattern:$0x73625140]
    %v32 = vld.sshfl [vmem:[#allocation1 + $0x8] sm:$0xff pattern:$0x73625140]
    %v33 = vld.sshfl [vmem:[#allocation1 + $0x10] sm:$0xff pattern:$0x73625140]
    %vm34 = vcmask 31744
    %v36 = vsel %vm34, %v27, 0
    %vm38 = vcmask 1041408
    %v39 = vsel %vm38, %v31, 0
    %v41 = vsel %vm38, %v32, 0
    %v43 = vsel %vm38, %v33, 0
    %45 = vmatpush.bf16.msra.mxu0 0
    %46 = vmatpush.bf16.msra.mxu0 0
    %47 = vmatpush.bf16.msra.mxu0 0
    %48 = vmatpush.bf16.msra.mxu0 0
    %49 = vmatpush.bf16.msra.mxu0 0
    %50 = vmatpush.bf16.msra.mxu0 0
    %51 = vmatpush.bf16.msra.mxu0 0
    %52 = vmatpush.bf16.msra.mxu0 %v39
    %53 = vmatmul.bf16.gmra.mxu0 %v36
    %v54 = vpop.f32.mrf.mxu0
    %v55 = vadd.f32 0.0, %v54
    %v56 = vpop.f32.mrf.mxu0
    %57 = vdwg.mxu0
    %58 = vmatpush.bf16.msra.mxu0 0
    %59 = vmatpush.bf16.msra.mxu0 0
    %60 = vmatpush.bf16.msra.mxu0 0
    %61 = vmatpush.bf16.msra.mxu0 0
    %62 = vmatpush.bf16.msra.mxu0 0
    %63 = vmatpush.bf16.msra.mxu0 0
    %64 = vmatpush.bf16.msra.mxu0 0
    %65 = vmatpush.bf16.msra.mxu0 %v41
    %66 = vmatmul.bf16.gmra.mxu0 %v36
    %v67 = vpop.f32.mrf.mxu0
    %v68 = vadd.f32 0.0, %v67
    %v69 = vpop.f32.mrf.mxu0
    %70 = vdwg.mxu0
    %71 = vmatpush.bf16.msra.mxu0 0
    %72 = vmatpush.bf16.msra.mxu0 0
    %73 = vmatpush.bf16.msra.mxu0 0
    %74 = vmatpush.bf16.msra.mxu0 0
    %75 = vmatpush.bf16.msra.mxu0 0
    %76 = vmatpush.bf16.msra.mxu0 0
    %77 = vmatpush.bf16.msra.mxu0 0
    %78 = vmatpush.bf16.msra.mxu0 %v43
    %79 = vmatmul.bf16.gmra.mxu0 %v36
    %v80 = vpop.f32.mrf.mxu0
    %v81 = vadd.f32 0.0, %v80
    %v82 = vpop.f32.mrf.mxu0
    %83 = vdwg.mxu0
    %v84 = vadd.f32 %v25, %v55
    %v85 = vadd.f32 %v25, %v68
    %v86 = vadd.f32 %v25, %v81
    %s87 = scalar_lea.vmem %s1, 4
    %v88 = vld [vmem:[%s87] sm:$0xf]
    %v89 = vld [vmem:[%s0] sm:$0x3f]
    %91 = vst [vmem:[#allocation1] ss:$4 sm:$0xff] %v89
    %v92 = vld.sshfl [vmem:[#allocation1] sm:$0xff pattern:$0x73625140]
    %v94 = vld.sshfl [vmem:[#allocation1 + $0x8] sm:$0xff pattern:$0x73625140]
    %v96 = vld.sshfl [vmem:[#allocation1 + $0x10] sm:$0xff pattern:$0x73625140]
    %98 = vrot.lane.b32.xlu0 %v92, 127
    %v99 = vpop.permute.xlu0 %98
    %100 = vrot.lane.b32.xlu0 %v94, 127
    %v101 = vpop.permute.xlu0 %100
    %102 = vrot.lane.b32.xlu0 %v96, 127
    %v103 = vpop.permute.xlu0 %102
    %vm104 = vcmask 1039360
    %v105 = vsel %vm104, %v99, %v101
    %v106 = vsel %vm104, %v101, %v103
    %v108 = vsel %vm34, %v88, 0
    %v111 = vsel %vm38, %v105, 0
    %v114 = vsel %vm38, %v106, 0
    %v117 = vsel %vm38, %v103, 0
    %119 = vmatpush.bf16.msra.mxu0 0
    %120 = vmatpush.bf16.msra.mxu0 0
    %121 = vmatpush.bf16.msra.mxu0 0
    %122 = vmatpush.bf16.msra.mxu0 0
    %123 = vmatpush.bf16.msra.mxu0 0
    %124 = vmatpush.bf16.msra.mxu0 0
    %125 = vmatpush.bf16.msra.mxu0 0
    %126 = vmatpush.bf16.msra.mxu0 %v111
    %127 = vmatmul.bf16.gmra.mxu0 %v108
    %v128 = vpop.f32.mrf.mxu0
    %v129 = vadd.f32 0.0, %v128
    %v130 = vpop.f32.mrf.mxu0
    %131 = vdwg.mxu0
    %132 = vmatpush.bf16.msra.mxu0 0
    %133 = vmatpush.bf16.msra.mxu0 0
    %134 = vmatpush.bf16.msra.mxu0 0
    %135 = vmatpush.bf16.msra.mxu0 0
    %136 = vmatpush.bf16.msra.mxu0 0
    %137 = vmatpush.bf16.msra.mxu0 0
    %138 = vmatpush.bf16.msra.mxu0 0
    %139 = vmatpush.bf16.msra.mxu0 %v114
    %140 = vmatmul.bf16.gmra.mxu0 %v108
    %v141 = vpop.f32.mrf.mxu0
    %v142 = vadd.f32 0.0, %v141
    %v143 = vpop.f32.mrf.mxu0
    %144 = vdwg.mxu0
    %145 = vmatpush.bf16.msra.mxu0 0
    %146 = vmatpush.bf16.msra.mxu0 0
    %147 = vmatpush.bf16.msra.mxu0 0
    %148 = vmatpush.bf16.msra.mxu0 0
    %149 = vmatpush.bf16.msra.mxu0 0
    %150 = vmatpush.bf16.msra.mxu0 0
    %151 = vmatpush.bf16.msra.mxu0 0
    %152 = vmatpush.bf16.msra.mxu0 %v117
    %153 = vmatmul.bf16.gmra.mxu0 %v108
    %v154 = vpop.f32.mrf.mxu0
    %v155 = vadd.f32 0.0, %v154
    %v156 = vpop.f32.mrf.mxu0
    %157 = vdwg.mxu0
    %v158 = vadd.f32 %v84, %v129
    %v159 = vadd.f32 %v85, %v142
    %v160 = vadd.f32 %v86, %v155
    %s161 = scalar_lea.vmem %s1, 8
    %v162 = vld [vmem:[%s161] sm:$0xf]
    %v163 = vld [vmem:[%s0] sm:$0x3f]
    %165 = vst [vmem:[#allocation1] ss:$4 sm:$0xff] %v163
    %v166 = vld.sshfl [vmem:[#allocation1] sm:$0xff pattern:$0x73625140]
    %v168 = vld.sshfl [vmem:[#allocation1 + $0x8] sm:$0xff pattern:$0x73625140]
    %v170 = vld.sshfl [vmem:[#allocation1 + $0x10] sm:$0xff pattern:$0x73625140]
    %172 = vrot.lane.b32.xlu0 %v166, 126
    %v173 = vpop.permute.xlu0 %172
    %174 = vrot.lane.b32.xlu0 %v168, 126
    %v175 = vpop.permute.xlu0 %174
    %176 = vrot.lane.b32.xlu0 %v170, 126
    %v177 = vpop.permute.xlu0 %176
    %vm178 = vcmask 1031168
    %v179 = vsel %vm178, %v173, %v175
    %v180 = vsel %vm178, %v175, %v177
    %v182 = vsel %vm34, %v162, 0
    %v185 = vsel %vm38, %v179, 0
    %v188 = vsel %vm38, %v180, 0
    %v191 = vsel %vm38, %v177, 0
    %193 = vmatpush.bf16.msra.mxu0 0
    %194 = vmatpush.bf16.msra.mxu0 0
    %195 = vmatpush.bf16.msra.mxu0 0
    %196 = vmatpush.bf16.msra.mxu0 0
    %197 = vmatpush.bf16.msra.mxu0 0
    %198 = vmatpush.bf16.msra.mxu0 0
    %199 = vmatpush.bf16.msra.mxu0 0
    %200 = vmatpush.bf16.msra.mxu0 %v185
    %201 = vmatmul.bf16.gmra.mxu0 %v182
    %v202 = vpop.f32.mrf.mxu0
    %v203 = vadd.f32 0.0, %v202
    %v204 = vpop.f32.mrf.mxu0
    %205 = vdwg.mxu0
    %206 = vmatpush.bf16.msra.mxu0 0
    %207 = vmatpush.bf16.msra.mxu0 0
    %208 = vmatpush.bf16.msra.mxu0 0
    %209 = vmatpush.bf16.msra.mxu0 0
    %210 = vmatpush.bf16.msra.mxu0 0
    %211 = vmatpush.bf16.msra.mxu0 0
    %212 = vmatpush.bf16.msra.mxu0 0
    %213 = vmatpush.bf16.msra.mxu0 %v188
    %214 = vmatmul.bf16.gmra.mxu0 %v182
    %v215 = vpop.f32.mrf.mxu0
    %v216 = vadd.f32 0.0, %v215
    %v217 = vpop.f32.mrf.mxu0
    %218 = vdwg.mxu0
    %219 = vmatpush.bf16.msra.mxu0 0
    %220 = vmatpush.bf16.msra.mxu0 0
    %221 = vmatpush.bf16.msra.mxu0 0
    %222 = vmatpush.bf16.msra.mxu0 0
    %223 = vmatpush.bf16.msra.mxu0 0
    %224 = vmatpush.bf16.msra.mxu0 0
    %225 = vmatpush.bf16.msra.mxu0 0
    %226 = vmatpush.bf16.msra.mxu0 %v191
    %227 = vmatmul.bf16.gmra.mxu0 %v182
    %v228 = vpop.f32.mrf.mxu0
    %v229 = vadd.f32 0.0, %v228
    %v230 = vpop.f32.mrf.mxu0
    %231 = vdwg.mxu0
    %v232 = vadd.f32 %v158, %v203
    %v233 = vadd.f32 %v159, %v216
    %v234 = vadd.f32 %v160, %v229
    %s235 = scalar_lea.vmem %s1, 12
    %v236 = vld [vmem:[%s235] sm:$0xf]
    %v237 = vld [vmem:[%s0] sm:$0x3f]
    %239 = vst [vmem:[#allocation1] ss:$4 sm:$0xff] %v237
    %v240 = vld.sshfl [vmem:[#allocation1] sm:$0xff pattern:$0x73625140]
    %v242 = vld.sshfl [vmem:[#allocation1 + $0x8] sm:$0xff pattern:$0x73625140]
    %v244 = vld.sshfl [vmem:[#allocation1 + $0x10] sm:$0xff pattern:$0x73625140]
    %246 = vrot.lane.b32.xlu0 %v240, 110
    %v247 = vpop.permute.xlu0 %246
    %248 = vrot.lane.b32.xlu0 %v242, 110
    %v249 = vpop.permute.xlu0 %248
    %250 = vrot.lane.b32.xlu0 %v244, 110
    %v251 = vpop.permute.xlu0 %250
    %vm252 = vcmask 900096
    %v253 = vsel %vm252, %v247, %v249
    %v254 = vsel %vm252, %v249, %v251
    %v256 = vsel %vm34, %v236, 0
    %v259 = vsel %vm38, %v253, 0
    %v262 = vsel %vm38, %v254, 0
    %v265 = vsel %vm38, %v251, 0
    %267 = vmatpush.bf16.msra.mxu0 0
    %268 = vmatpush.bf16.msra.mxu0 0
    %269 = vmatpush.bf16.msra.mxu0 0
    %270 = vmatpush.bf16.msra.mxu0 0
    %271 = vmatpush.bf16.msra.mxu0 0
    %272 = vmatpush.bf16.msra.mxu0 0
    %273 = vmatpush.bf16.msra.mxu0 0
    %274 = vmatpush.bf16.msra.mxu0 %v259
    %275 = vmatmul.bf16.gmra.mxu0 %v256
    %v276 = vpop.f32.mrf.mxu0
    %v277 = vadd.f32 0.0, %v276
    %v278 = vpop.f32.mrf.mxu0
    %279 = vdwg.mxu0
    %280 = vmatpush.bf16.msra.mxu0 0
    %281 = vmatpush.bf16.msra.mxu0 0
    %282 = vmatpush.bf16.msra.mxu0 0
    %283 = vmatpush.bf16.msra.mxu0 0
    %284 = vmatpush.bf16.msra.mxu0 0
    %285 = vmatpush.bf16.msra.mxu0 0
    %286 = vmatpush.bf16.msra.mxu0 0
    %287 = vmatpush.bf16.msra.mxu0 %v262
    %288 = vmatmul.bf16.gmra.mxu0 %v256
    %v289 = vpop.f32.mrf.mxu0
    %v290 = vadd.f32 0.0, %v289
    %v291 = vpop.f32.mrf.mxu0
    %292 = vdwg.mxu0
    %293 = vmatpush.bf16.msra.mxu0 0
    %294 = vmatpush.bf16.msra.mxu0 0
    %295 = vmatpush.bf16.msra.mxu0 0
    %296 = vmatpush.bf16.msra.mxu0 0
    %297 = vmatpush.bf16.msra.mxu0 0
    %298 = vmatpush.bf16.msra.mxu0 0
    %299 = vmatpush.bf16.msra.mxu0 0
    %300 = vmatpush.bf16.msra.mxu0 %v265
    %301 = vmatmul.bf16.gmra.mxu0 %v256
    %v302 = vpop.f32.mrf.mxu0
    %v303 = vadd.f32 0.0, %v302
    %v304 = vpop.f32.mrf.mxu0
    %305 = vdwg.mxu0
    %v306 = vadd.f32 %v232, %v277
    %v307 = vadd.f32 %v233, %v290
    %v308 = vadd.f32 %v234, %v303
    %s309 = scalar_lea.vmem %s1, 16
    %v310 = vld [vmem:[%s309] sm:$0xf]
    %v311 = vld [vmem:[%s0] sm:$0x3f]
    %313 = vst [vmem:[#allocation1] ss:$4 sm:$0xff] %v311
    %v314 = vld.sshfl [vmem:[#allocation1] sm:$0xff pattern:$0x73625140]
    %v316 = vld.sshfl [vmem:[#allocation1 + $0x8] sm:$0xff pattern:$0x73625140]
    %v318 = vld.sshfl [vmem:[#allocation1 + $0x10] sm:$0xff pattern:$0x73625140]
    %320 = vrot.lane.b32.xlu0 %v314, 109
    %v321 = vpop.permute.xlu0 %320
    %322 = vrot.lane.b32.xlu0 %v316, 109
    %v323 = vpop.permute.xlu0 %322
    %324 = vrot.lane.b32.xlu0 %v318, 109
    %v325 = vpop.permute.xlu0 %324
    %vm326 = vcmask 891904
    %v327 = vsel %vm326, %v321, %v323
    %v328 = vsel %vm326, %v323, %v325
    %v330 = vsel %vm34, %v310, 0
    %v333 = vsel %vm38, %v327, 0
    %v336 = vsel %vm38, %v328, 0
    %v339 = vsel %vm38, %v325, 0
    %341 = vmatpush.bf16.msra.mxu0 0
    %342 = vmatpush.bf16.msra.mxu0 0
    %343 = vmatpush.bf16.msra.mxu0 0
    %344 = vmatpush.bf16.msra.mxu0 0
    %345 = vmatpush.bf16.msra.mxu0 0
    %346 = vmatpush.bf16.msra.mxu0 0
    %347 = vmatpush.bf16.msra.mxu0 0
    %348 = vmatpush.bf16.msra.mxu0 %v333
    %349 = vmatmul.bf16.gmra.mxu0 %v330
    %v350 = vpop.f32.mrf.mxu0
    %v351 = vadd.f32 0.0, %v350
    %v352 = vpop.f32.mrf.mxu0
    %353 = vdwg.mxu0
    %354 = vmatpush.bf16.msra.mxu0 0
    %355 = vmatpush.bf16.msra.mxu0 0
    %356 = vmatpush.bf16.msra.mxu0 0
    %357 = vmatpush.bf16.msra.mxu0 0
    %358 = vmatpush.bf16.msra.mxu0 0
    %359 = vmatpush.bf16.msra.mxu0 0
    %360 = vmatpush.bf16.msra.mxu0 0
    %361 = vmatpush.bf16.msra.mxu0 %v336
    %362 = vmatmul.bf16.gmra.mxu0 %v330
    %v363 = vpop.f32.mrf.mxu0
    %v364 = vadd.f32 0.0, %v363
    %v365 = vpop.f32.mrf.mxu0
    %366 = vdwg.mxu0
    %367 = vmatpush.bf16.msra.mxu0 0
    %368 = vmatpush.bf16.msra.mxu0 0
    %369 = vmatpush.bf16.msra.mxu0 0
    %370 = vmatpush.bf16.msra.mxu0 0
    %371 = vmatpush.bf16.msra.mxu0 0
    %372 = vmatpush.bf16.msra.mxu0 0
    %373 = vmatpush.bf16.msra.mxu0 0
    %374 = vmatpush.bf16.msra.mxu0 %v339
    %375 = vmatmul.bf16.gmra.mxu0 %v330
    %v376 = vpop.f32.mrf.mxu0
    %v377 = vadd.f32 0.0, %v376
    %v378 = vpop.f32.mrf.mxu0
    %379 = vdwg.mxu0
    %v380 = vadd.f32 %v306, %v351
    %v381 = vadd.f32 %v307, %v364
    %v382 = vadd.f32 %v308, %v377
    %s383 = scalar_lea.vmem %s1, 20
    %v384 = vld [vmem:[%s383] sm:$0xf]
    %v385 = vld [vmem:[%s0] sm:$0x3f]
    %387 = vst [vmem:[#allocation1] ss:$4 sm:$0xff] %v385
    %v388 = vld.sshfl [vmem:[#allocation1] sm:$0xff pattern:$0x73625140]
    %v390 = vld.sshfl [vmem:[#allocation1 + $0x8] sm:$0xff pattern:$0x73625140]
    %v392 = vld.sshfl [vmem:[#allocation1 + $0x10] sm:$0xff pattern:$0x73625140]
    %394 = vrot.lane.b32.xlu0 %v388, 108
    %v395 = vpop.permute.xlu0 %394
    %396 = vrot.lane.b32.xlu0 %v390, 108
    %v397 = vpop.permute.xlu0 %396
    %398 = vrot.lane.b32.xlu0 %v392, 108
    %v399 = vpop.permute.xlu0 %398
    %vm400 = vcmask 883712
    %v401 = vsel %vm400, %v395, %v397
    %v402 = vsel %vm400, %v397, %v399
    %v404 = vsel %vm34, %v384, 0
    %v407 = vsel %vm38, %v401, 0
    %v410 = vsel %vm38, %v402, 0
    %v413 = vsel %vm38, %v399, 0
    %415 = vmatpush.bf16.msra.mxu0 0
    %416 = vmatpush.bf16.msra.mxu0 0
    %417 = vmatpush.bf16.msra.mxu0 0
    %418 = vmatpush.bf16.msra.mxu0 0
    %419 = vmatpush.bf16.msra.mxu0 0
    %420 = vmatpush.bf16.msra.mxu0 0
    %421 = vmatpush.bf16.msra.mxu0 0
    %422 = vmatpush.bf16.msra.mxu0 %v407
    %423 = vmatmul.bf16.gmra.mxu0 %v404
    %v424 = vpop.f32.mrf.mxu0
    %v425 = vadd.f32 0.0, %v424
    %v426 = vpop.f32.mrf.mxu0
    %427 = vdwg.mxu0
    %428 = vmatpush.bf16.msra.mxu0 0
    %429 = vmatpush.bf16.msra.mxu0 0
    %430 = vmatpush.bf16.msra.mxu0 0
    %431 = vmatpush.bf16.msra.mxu0 0
    %432 = vmatpush.bf16.msra.mxu0 0
    %433 = vmatpush.bf16.msra.mxu0 0
    %434 = vmatpush.bf16.msra.mxu0 0
    %435 = vmatpush.bf16.msra.mxu0 %v410
    %436 = vmatmul.bf16.gmra.mxu0 %v404
    %v437 = vpop.f32.mrf.mxu0
    %v438 = vadd.f32 0.0, %v437
    %v439 = vpop.f32.mrf.mxu0
    %440 = vdwg.mxu0
    %441 = vmatpush.bf16.msra.mxu0 0
    %442 = vmatpush.bf16.msra.mxu0 0
    %443 = vmatpush.bf16.msra.mxu0 0
    %444 = vmatpush.bf16.msra.mxu0 0
    %445 = vmatpush.bf16.msra.mxu0 0
    %446 = vmatpush.bf16.msra.mxu0 0
    %447 = vmatpush.bf16.msra.mxu0 0
    %448 = vmatpush.bf16.msra.mxu0 %v413
    %449 = vmatmul.bf16.gmra.mxu0 %v404
    %v450 = vpop.f32.mrf.mxu0
    %v451 = vadd.f32 0.0, %v450
    %v452 = vpop.f32.mrf.mxu0
    %453 = vdwg.mxu0
    %v454 = vadd.f32 %v380, %v425
    %v455 = vadd.f32 %v381, %v438
    %v456 = vadd.f32 %v382, %v451
    %s457 = scalar_lea.vmem %s1, 24
    %v458 = vld [vmem:[%s457] sm:$0xf]
    %v459 = vld [vmem:[%s0] sm:$0x3f]
    %461 = vst [vmem:[#allocation1] ss:$4 sm:$0xff] %v459
    %v462 = vld.sshfl [vmem:[#allocation1] sm:$0xff pattern:$0x73625140]
    %v464 = vld.sshfl [vmem:[#allocation1 + $0x8] sm:$0xff pattern:$0x73625140]
    %v466 = vld.sshfl [vmem:[#allocation1 + $0x10] sm:$0xff pattern:$0x73625140]
    %468 = vrot.lane.b32.xlu0 %v462, 92
    %v469 = vpop.permute.xlu0 %468
    %470 = vrot.lane.b32.xlu0 %v464, 92
    %v471 = vpop.permute.xlu0 %470
    %472 = vrot.lane.b32.xlu0 %v466, 92
    %v473 = vpop.permute.xlu0 %472
    %vm474 = vcmask 752640
    %v475 = vsel %vm474, %v469, %v471
    %v476 = vsel %vm474, %v471, %v473
    %v478 = vsel %vm34, %v458, 0
    %v481 = vsel %vm38, %v475, 0
    %v484 = vsel %vm38, %v476, 0
    %v487 = vsel %vm38, %v473, 0
    %489 = vmatpush.bf16.msra.mxu0 0
    %490 = vmatpush.bf16.msra.mxu0 0
    %491 = vmatpush.bf16.msra.mxu0 0
    %492 = vmatpush.bf16.msra.mxu0 0
    %493 = vmatpush.bf16.msra.mxu0 0
    %494 = vmatpush.bf16.msra.mxu0 0
    %495 = vmatpush.bf16.msra.mxu0 0
    %496 = vmatpush.bf16.msra.mxu0 %v481
    %497 = vmatmul.bf16.gmra.mxu0 %v478
    %v498 = vpop.f32.mrf.mxu0
    %v499 = vadd.f32 0.0, %v498
    %v500 = vpop.f32.mrf.mxu0
    %501 = vdwg.mxu0
    %502 = vmatpush.bf16.msra.mxu0 0
    %503 = vmatpush.bf16.msra.mxu0 0
    %504 = vmatpush.bf16.msra.mxu0 0
    %505 = vmatpush.bf16.msra.mxu0 0
    %506 = vmatpush.bf16.msra.mxu0 0
    %507 = vmatpush.bf16.msra.mxu0 0
    %508 = vmatpush.bf16.msra.mxu0 0
    %509 = vmatpush.bf16.msra.mxu0 %v484
    %510 = vmatmul.bf16.gmra.mxu0 %v478
    %v511 = vpop.f32.mrf.mxu0
    %v512 = vadd.f32 0.0, %v511
    %v513 = vpop.f32.mrf.mxu0
    %514 = vdwg.mxu0
    %515 = vmatpush.bf16.msra.mxu0 0
    %516 = vmatpush.bf16.msra.mxu0 0
    %517 = vmatpush.bf16.msra.mxu0 0
    %518 = vmatpush.bf16.msra.mxu0 0
    %519 = vmatpush.bf16.msra.mxu0 0
    %520 = vmatpush.bf16.msra.mxu0 0
    %521 = vmatpush.bf16.msra.mxu0 0
    %522 = vmatpush.bf16.msra.mxu0 %v487
    %523 = vmatmul.bf16.gmra.mxu0 %v478
    %v524 = vpop.f32.mrf.mxu0
    %v525 = vadd.f32 0.0, %v524
    %v526 = vpop.f32.mrf.mxu0
    %527 = vdwg.mxu0
    %v528 = vadd.f32 %v454, %v499
    %v529 = vadd.f32 %v455, %v512
    %v530 = vadd.f32 %v456, %v525
    %s531 = scalar_lea.vmem %s1, 28
    %v532 = vld [vmem:[%s531] sm:$0xf]
    %v533 = vld [vmem:[%s0] sm:$0x3f]
    %535 = vst [vmem:[#allocation1] ss:$4 sm:$0xff] %v533
    %v536 = vld.sshfl [vmem:[#allocation1] sm:$0xff pattern:$0x73625140]
    %v538 = vld.sshfl [vmem:[#allocation1 + $0x8] sm:$0xff pattern:$0x73625140]
    %v540 = vld.sshfl [vmem:[#allocation1 + $0x10] sm:$0xff pattern:$0x73625140]
    %542 = vrot.lane.b32.xlu0 %v536, 91
    %v543 = vpop.permute.xlu0 %542
    %544 = vrot.lane.b32.xlu0 %v538, 91
    %v545 = vpop.permute.xlu0 %544
    %546 = vrot.lane.b32.xlu0 %v540, 91
    %v547 = vpop.permute.xlu0 %546
    %vm548 = vcmask 744448
    %v549 = vsel %vm548, %v543, %v545
    %v550 = vsel %vm548, %v545, %v547
    %v552 = vsel %vm34, %v532, 0
    %v555 = vsel %vm38, %v549, 0
    %v558 = vsel %vm38, %v550, 0
    %v561 = vsel %vm38, %v547, 0
    %563 = vmatpush.bf16.msra.mxu0 0
    %564 = vmatpush.bf16.msra.mxu0 0
    %565 = vmatpush.bf16.msra.mxu0 0
    %566 = vmatpush.bf16.msra.mxu0 0
    %567 = vmatpush.bf16.msra.mxu0 0
    %568 = vmatpush.bf16.msra.mxu0 0
    %569 = vmatpush.bf16.msra.mxu0 0
    %570 = vmatpush.bf16.msra.mxu0 %v555
    %571 = vmatmul.bf16.gmra.mxu0 %v552
    %v572 = vpop.f32.mrf.mxu0
    %v573 = vadd.f32 0.0, %v572
    %v574 = vpop.f32.mrf.mxu0
    %575 = vdwg.mxu0
    %576 = vmatpush.bf16.msra.mxu0 0
    %577 = vmatpush.bf16.msra.mxu0 0
    %578 = vmatpush.bf16.msra.mxu0 0
    %579 = vmatpush.bf16.msra.mxu0 0
    %580 = vmatpush.bf16.msra.mxu0 0
    %581 = vmatpush.bf16.msra.mxu0 0
    %582 = vmatpush.bf16.msra.mxu0 0
    %583 = vmatpush.bf16.msra.mxu0 %v558
    %584 = vmatmul.bf16.gmra.mxu0 %v552
    %v585 = vpop.f32.mrf.mxu0
    %v586 = vadd.f32 0.0, %v585
    %v587 = vpop.f32.mrf.mxu0
    %588 = vdwg.mxu0
    %589 = vmatpush.bf16.msra.mxu0 0
    %590 = vmatpush.bf16.msra.mxu0 0
    %591 = vmatpush.bf16.msra.mxu0 0
    %592 = vmatpush.bf16.msra.mxu0 0
    %593 = vmatpush.bf16.msra.mxu0 0
    %594 = vmatpush.bf16.msra.mxu0 0
    %595 = vmatpush.bf16.msra.mxu0 0
    %596 = vmatpush.bf16.msra.mxu0 %v561
    %597 = vmatmul.bf16.gmra.mxu0 %v552
    %v598 = vpop.f32.mrf.mxu0
    %v599 = vadd.f32 0.0, %v598
    %v600 = vpop.f32.mrf.mxu0
    %601 = vdwg.mxu0
    %v602 = vadd.f32 %v528, %v573
    %v603 = vadd.f32 %v529, %v586
    %v604 = vadd.f32 %v530, %v599
    %s605 = scalar_lea.vmem %s1, 32
    %v606 = vld [vmem:[%s605] sm:$0xf]
    %v607 = vld [vmem:[%s0] sm:$0x3f]
    %609 = vst [vmem:[#allocation1] ss:$4 sm:$0xff] %v607
    %v610 = vld.sshfl [vmem:[#allocation1] sm:$0xff pattern:$0x73625140]
    %v612 = vld.sshfl [vmem:[#allocation1 + $0x8] sm:$0xff pattern:$0x73625140]
    %v614 = vld.sshfl [vmem:[#allocation1 + $0x10] sm:$0xff pattern:$0x73625140]
    %616 = vrot.lane.b32.xlu0 %v610, 90
    %v617 = vpop.permute.xlu0 %616
    %618 = vrot.lane.b32.xlu0 %v612, 90
    %v619 = vpop.permute.xlu0 %618
    %620 = vrot.lane.b32.xlu0 %v614, 90
    %v621 = vpop.permute.xlu0 %620
    %vm622 = vcmask 736256
    %v623 = vsel %vm622, %v617, %v619
    %v624 = vsel %vm622, %v619, %v621
    %v626 = vsel %vm34, %v606, 0
    %v629 = vsel %vm38, %v623, 0
    %v632 = vsel %vm38, %v624, 0
    %v635 = vsel %vm38, %v621, 0
    %637 = vmatpush.bf16.msra.mxu0 0
    %638 = vmatpush.bf16.msra.mxu0 0
    %639 = vmatpush.bf16.msra.mxu0 0
    %640 = vmatpush.bf16.msra.mxu0 0
    %641 = vmatpush.bf16.msra.mxu0 0
    %642 = vmatpush.bf16.msra.mxu0 0
    %643 = vmatpush.bf16.msra.mxu0 0
    %644 = vmatpush.bf16.msra.mxu0 %v629
    %645 = vmatmul.bf16.gmra.mxu0 %v626
    %v646 = vpop.f32.mrf.mxu0
    %v647 = vadd.f32 0.0, %v646
    %v648 = vpop.f32.mrf.mxu0
    %649 = vdwg.mxu0
    %650 = vmatpush.bf16.msra.mxu0 0
    %651 = vmatpush.bf16.msra.mxu0 0
    %652 = vmatpush.bf16.msra.mxu0 0
    %653 = vmatpush.bf16.msra.mxu0 0
    %654 = vmatpush.bf16.msra.mxu0 0
    %655 = vmatpush.bf16.msra.mxu0 0
    %656 = vmatpush.bf16.msra.mxu0 0
    %657 = vmatpush.bf16.msra.mxu0 %v632
    %658 = vmatmul.bf16.gmra.mxu0 %v626
    %v659 = vpop.f32.mrf.mxu0
    %v660 = vadd.f32 0.0, %v659
    %v661 = vpop.f32.mrf.mxu0
    %662 = vdwg.mxu0
    %663 = vmatpush.bf16.msra.mxu0 0
    %664 = vmatpush.bf16.msra.mxu0 0
    %665 = vmatpush.bf16.msra.mxu0 0
    %666 = vmatpush.bf16.msra.mxu0 0
    %667 = vmatpush.bf16.msra.mxu0 0
    %668 = vmatpush.bf16.msra.mxu0 0
    %669 = vmatpush.bf16.msra.mxu0 0
    %670 = vmatpush.bf16.msra.mxu0 %v635
    %671 = vmatmul.bf16.gmra.mxu0 %v626
    %v672 = vpop.f32.mrf.mxu0
    %v673 = vadd.f32 0.0, %v672
    %v674 = vpop.f32.mrf.mxu0
    %675 = vdwg.mxu0
    %v676 = vadd.f32 %v602, %v647
    %v677 = vadd.f32 %v603, %v660
    %v678 = vadd.f32 %v604, %v673
    %vm679 = vcmp.ge.f32.partialorder %v676, 0.0
    %vm680 = vcmp.ge.f32.partialorder %v677, 0.0
    %vm681 = vcmp.ge.f32.partialorder %v678, 0.0
    %v682 = vstv %s20
    %v683 = vmul.f32 %v682, %v676
    %v684 = vmul.f32 %v682, %v677
    %v685 = vmul.f32 %v682, %v678
    %v686 = vsel %vm679, %v676, %v683
    %v687 = vsel %vm680, %v677, %v684
    %v688 = vsel %vm681, %v678, %v685
    %689 = vst [vmem:[#allocation3] sm:$0xff] %v686
    %690 = vst [vmem:[#allocation3 + $0x8] sm:$0xff] %v687
    %vm691 = vcmask 261120
    %692 = vst.msk [vmem:[#allocation3 + $0x10] sm:$0xff] %vm691, %v688
    %v693 = vld [vmem:[%s1] sm:$0xf]
    %s694 = scalar_lea.vmem %s0, 6
    %v695 = vld [vmem:[%s694] sm:$0x3f]
    %697 = vst [vmem:[#allocation1] ss:$4 sm:$0xff] %v695
    %v698 = vld.sshfl [vmem:[#allocation1] sm:$0xff pattern:$0x73625140]
    %v699 = vld.sshfl [vmem:[#allocation1 + $0x8] sm:$0xff pattern:$0x73625140]
    %v700 = vld.sshfl [vmem:[#allocation1 + $0x10] sm:$0xff pattern:$0x73625140]
    %v702 = vsel %vm34, %v693, 0
    %v704 = vsel %vm38, %v698, 0
    %v706 = vsel %vm38, %v699, 0
    %v708 = vsel %vm38, %v700, 0
    %710 = vmatpush.bf16.msra.mxu0 0
    %711 = vmatpush.bf16.msra.mxu0 0
    %712 = vmatpush.bf16.msra.mxu0 0
    %713 = vmatpush.bf16.msra.mxu0 0
    %714 = vmatpush.bf16.msra.mxu0 0
    %715 = vmatpush.bf16.msra.mxu0 0
    %716 = vmatpush.bf16.msra.mxu0 0
    %717 = vmatpush.bf16.msra.mxu0 %v704
    %718 = vmatmul.bf16.gmra.mxu0 %v702
    %v719 = vpop.f32.mrf.mxu0
    %v720 = vadd.f32 0.0, %v719
    %v721 = vpop.f32.mrf.mxu0
    %722 = vdwg.mxu0
    %723 = vmatpush.bf16.msra.mxu0 0
    %724 = vmatpush.bf16.msra.mxu0 0
    %725 = vmatpush.bf16.msra.mxu0 0
    %726 = vmatpush.bf16.msra.mxu0 0
    %727 = vmatpush.bf16.msra.mxu0 0
    %728 = vmatpush.bf16.msra.mxu0 0
    %729 = vmatpush.bf16.msra.mxu0 0
    %730 = vmatpush.bf16.msra.mxu0 %v706
    %731 = vmatmul.bf16.gmra.mxu0 %v702
    %v732 = vpop.f32.mrf.mxu0
    %v733 = vadd.f32 0.0, %v732
    %v734 = vpop.f32.mrf.mxu0
    %735 = vdwg.mxu0
    %736 = vmatpush.bf16.msra.mxu0 0
    %737 = vmatpush.bf16.msra.mxu0 0
    %738 = vmatpush.bf16.msra.mxu0 0
    %739 = vmatpush.bf16.msra.mxu0 0
    %740 = vmatpush.bf16.msra.mxu0 0
    %741 = vmatpush.bf16.msra.mxu0 0
    %742 = vmatpush.bf16.msra.mxu0 0
    %743 = vmatpush.bf16.msra.mxu0 %v708
    %744 = vmatmul.bf16.gmra.mxu0 %v702
    %v745 = vpop.f32.mrf.mxu0
    %v746 = vadd.f32 0.0, %v745
    %v747 = vpop.f32.mrf.mxu0
    %748 = vdwg.mxu0
    %v749 = vadd.f32 %v25, %v720
    %v750 = vadd.f32 %v25, %v733
    %v751 = vadd.f32 %v25, %v746
    %v752 = vld [vmem:[%s87] sm:$0xf]
    %v753 = vld [vmem:[%s694] sm:$0x3f]
    %755 = vst [vmem:[#allocation1] ss:$4 sm:$0xff] %v753
    %v756 = vld.sshfl [vmem:[#allocation1] sm:$0xff pattern:$0x73625140]
    %v758 = vld.sshfl [vmem:[#allocation1 + $0x8] sm:$0xff pattern:$0x73625140]
    %v760 = vld.sshfl [vmem:[#allocation1 + $0x10] sm:$0xff pattern:$0x73625140]
    %762 = vrot.lane.b32.xlu0 %v756, 127
    %v763 = vpop.permute.xlu0 %762
    %764 = vrot.lane.b32.xlu0 %v758, 127
    %v765 = vpop.permute.xlu0 %764
    %766 = vrot.lane.b32.xlu0 %v760, 127
    %v767 = vpop.permute.xlu0 %766
    %v768 = vsel %vm104, %v763, %v765
    %v769 = vsel %vm104, %v765, %v767
    %v771 = vsel %vm34, %v752, 0
    %v774 = vsel %vm38, %v768, 0
    %v777 = vsel %vm38, %v769, 0
    %v780 = vsel %vm38, %v767, 0
    %782 = vmatpush.bf16.msra.mxu0 0
    %783 = vmatpush.bf16.msra.mxu0 0
    %784 = vmatpush.bf16.msra.mxu0 0
    %785 = vmatpush.bf16.msra.mxu0 0
    %786 = vmatpush.bf16.msra.mxu0 0
    %787 = vmatpush.bf16.msra.mxu0 0
    %788 = vmatpush.bf16.msra.mxu0 0
    %789 = vmatpush.bf16.msra.mxu0 %v774
    %790 = vmatmul.bf16.gmra.mxu0 %v771
    %v791 = vpop.f32.mrf.mxu0
    %v792 = vadd.f32 0.0, %v791
    %v793 = vpop.f32.mrf.mxu0
    %794 = vdwg.mxu0
    %795 = vmatpush.bf16.msra.mxu0 0
    %796 = vmatpush.bf16.msra.mxu0 0
    %797 = vmatpush.bf16.msra.mxu0 0
    %798 = vmatpush.bf16.msra.mxu0 0
    %799 = vmatpush.bf16.msra.mxu0 0
    %800 = vmatpush.bf16.msra.mxu0 0
    %801 = vmatpush.bf16.msra.mxu0 0
    %802 = vmatpush.bf16.msra.mxu0 %v777
    %803 = vmatmul.bf16.gmra.mxu0 %v771
    %v804 = vpop.f32.mrf.mxu0
    %v805 = vadd.f32 0.0, %v804
    %v806 = vpop.f32.mrf.mxu0
    %807 = vdwg.mxu0
    %808 = vmatpush.bf16.msra.mxu0 0
    %809 = vmatpush.bf16.msra.mxu0 0
    %810 = vmatpush.bf16.msra.mxu0 0
    %811 = vmatpush.bf16.msra.mxu0 0
    %812 = vmatpush.bf16.msra.mxu0 0
    %813 = vmatpush.bf16.msra.mxu0 0
    %814 = vmatpush.bf16.msra.mxu0 0
    %815 = vmatpush.bf16.msra.mxu0 %v780
    %816 = vmatmul.bf16.gmra.mxu0 %v771
    %v817 = vpop.f32.mrf.mxu0
    %v818 = vadd.f32 0.0, %v817
    %v819 = vpop.f32.mrf.mxu0
    %820 = vdwg.mxu0
    %v821 = vadd.f32 %v749, %v792
    %v822 = vadd.f32 %v750, %v805
    %v823 = vadd.f32 %v751, %v818
    %v824 = vld [vmem:[%s161] sm:$0xf]
    %v825 = vld [vmem:[%s694] sm:$0x3f]
    %827 = vst [vmem:[#allocation1] ss:$4 sm:$0xff] %v825
    %v828 = vld.sshfl [vmem:[#allocation1] sm:$0xff pattern:$0x73625140]
    %v830 = vld.sshfl [vmem:[#allocation1 + $0x8] sm:$0xff pattern:$0x73625140]
    %v832 = vld.sshfl [vmem:[#allocation1 + $0x10] sm:$0xff pattern:$0x73625140]
    %834 = vrot.lane.b32.xlu0 %v828, 126
    %v835 = vpop.permute.xlu0 %834
    %836 = vrot.lane.b32.xlu0 %v830, 126
    %v837 = vpop.permute.xlu0 %836
    %838 = vrot.lane.b32.xlu0 %v832, 126
    %v839 = vpop.permute.xlu0 %838
    %v840 = vsel %vm178, %v835, %v837
    %v841 = vsel %vm178, %v837, %v839
    %v843 = vsel %vm34, %v824, 0
    %v846 = vsel %vm38, %v840, 0
    %v849 = vsel %vm38, %v841, 0
    %v852 = vsel %vm38, %v839, 0
    %854 = vmatpush.bf16.msra.mxu0 0
    %855 = vmatpush.bf16.msra.mxu0 0
    %856 = vmatpush.bf16.msra.mxu0 0
    %857 = vmatpush.bf16.msra.mxu0 0
    %858 = vmatpush.bf16.msra.mxu0 0
    %859 = vmatpush.bf16.msra.mxu0 0
    %860 = vmatpush.bf16.msra.mxu0 0
    %861 = vmatpush.bf16.msra.mxu0 %v846
    %862 = vmatmul.bf16.gmra.mxu0 %v843
    %v863 = vpop.f32.mrf.mxu0
    %v864 = vadd.f32 0.0, %v863
    %v865 = vpop.f32.mrf.mxu0
    %866 = vdwg.mxu0
    %867 = vmatpush.bf16.msra.mxu0 0
    %868 = vmatpush.bf16.msra.mxu0 0
    %869 = vmatpush.bf16.msra.mxu0 0
    %870 = vmatpush.bf16.msra.mxu0 0
    %871 = vmatpush.bf16.msra.mxu0 0
    %872 = vmatpush.bf16.msra.mxu0 0
    %873 = vmatpush.bf16.msra.mxu0 0
    %874 = vmatpush.bf16.msra.mxu0 %v849
    %875 = vmatmul.bf16.gmra.mxu0 %v843
    %v876 = vpop.f32.mrf.mxu0
    %v877 = vadd.f32 0.0, %v876
    %v878 = vpop.f32.mrf.mxu0
    %879 = vdwg.mxu0
    %880 = vmatpush.bf16.msra.mxu0 0
    %881 = vmatpush.bf16.msra.mxu0 0
    %882 = vmatpush.bf16.msra.mxu0 0
    %883 = vmatpush.bf16.msra.mxu0 0
    %884 = vmatpush.bf16.msra.mxu0 0
    %885 = vmatpush.bf16.msra.mxu0 0
    %886 = vmatpush.bf16.msra.mxu0 0
    %887 = vmatpush.bf16.msra.mxu0 %v852
    %888 = vmatmul.bf16.gmra.mxu0 %v843
    %v889 = vpop.f32.mrf.mxu0
    %v890 = vadd.f32 0.0, %v889
    %v891 = vpop.f32.mrf.mxu0
    %892 = vdwg.mxu0
    %v893 = vadd.f32 %v821, %v864
    %v894 = vadd.f32 %v822, %v877
    %v895 = vadd.f32 %v823, %v890
    %v896 = vld [vmem:[%s235] sm:$0xf]
    %v897 = vld [vmem:[%s694] sm:$0x3f]
    %899 = vst [vmem:[#allocation1] ss:$4 sm:$0xff] %v897
    %v900 = vld.sshfl [vmem:[#allocation1] sm:$0xff pattern:$0x73625140]
    %v902 = vld.sshfl [vmem:[#allocation1 + $0x8] sm:$0xff pattern:$0x73625140]
    %v904 = vld.sshfl [vmem:[#allocation1 + $0x10] sm:$0xff pattern:$0x73625140]
    %906 = vrot.lane.b32.xlu0 %v900, 110
    %v907 = vpop.permute.xlu0 %906
    %908 = vrot.lane.b32.xlu0 %v902, 110
    %v909 = vpop.permute.xlu0 %908
    %910 = vrot.lane.b32.xlu0 %v904, 110
    %v911 = vpop.permute.xlu0 %910
    %v912 = vsel %vm252, %v907, %v909
    %v913 = vsel %vm252, %v909, %v911
    %v915 = vsel %vm34, %v896, 0
    %v918 = vsel %vm38, %v912, 0
    %v921 = vsel %vm38, %v913, 0
    %v924 = vsel %vm38, %v911, 0
    %926 = vmatpush.bf16.msra.mxu0 0
    %927 = vmatpush.bf16.msra.mxu0 0
    %928 = vmatpush.bf16.msra.mxu0 0
    %929 = vmatpush.bf16.msra.mxu0 0
    %930 = vmatpush.bf16.msra.mxu0 0
    %931 = vmatpush.bf16.msra.mxu0 0
    %932 = vmatpush.bf16.msra.mxu0 0
    %933 = vmatpush.bf16.msra.mxu0 %v918
    %934 = vmatmul.bf16.gmra.mxu0 %v915
    %v935 = vpop.f32.mrf.mxu0
    %v936 = vadd.f32 0.0, %v935
    %v937 = vpop.f32.mrf.mxu0
    %938 = vdwg.mxu0
    %939 = vmatpush.bf16.msra.mxu0 0
    %940 = vmatpush.bf16.msra.mxu0 0
    %941 = vmatpush.bf16.msra.mxu0 0
    %942 = vmatpush.bf16.msra.mxu0 0
    %943 = vmatpush.bf16.msra.mxu0 0
    %944 = vmatpush.bf16.msra.mxu0 0
    %945 = vmatpush.bf16.msra.mxu0 0
    %946 = vmatpush.bf16.msra.mxu0 %v921
    %947 = vmatmul.bf16.gmra.mxu0 %v915
    %v948 = vpop.f32.mrf.mxu0
    %v949 = vadd.f32 0.0, %v948
    %v950 = vpop.f32.mrf.mxu0
    %951 = vdwg.mxu0
    %952 = vmatpush.bf16.msra.mxu0 0
    %953 = vmatpush.bf16.msra.mxu0 0
    %954 = vmatpush.bf16.msra.mxu0 0
    %955 = vmatpush.bf16.msra.mxu0 0
    %956 = vmatpush.bf16.msra.mxu0 0
    %957 = vmatpush.bf16.msra.mxu0 0
    %958 = vmatpush.bf16.msra.mxu0 0
    %959 = vmatpush.bf16.msra.mxu0 %v924
    %960 = vmatmul.bf16.gmra.mxu0 %v915
    %v961 = vpop.f32.mrf.mxu0
    %v962 = vadd.f32 0.0, %v961
    %v963 = vpop.f32.mrf.mxu0
    %964 = vdwg.mxu0
    %v965 = vadd.f32 %v893, %v936
    %v966 = vadd.f32 %v894, %v949
    %v967 = vadd.f32 %v895, %v962
    %v968 = vld [vmem:[%s309] sm:$0xf]
    %v969 = vld [vmem:[%s694] sm:$0x3f]
    %971 = vst [vmem:[#allocation1] ss:$4 sm:$0xff] %v969
    %v972 = vld.sshfl [vmem:[#allocation1] sm:$0xff pattern:$0x73625140]
    %v974 = vld.sshfl [vmem:[#allocation1 + $0x8] sm:$0xff pattern:$0x73625140]
    %v976 = vld.sshfl [vmem:[#allocation1 + $0x10] sm:$0xff pattern:$0x73625140]
    %978 = vrot.lane.b32.xlu0 %v972, 109
    %v979 = vpop.permute.xlu0 %978
    %980 = vrot.lane.b32.xlu0 %v974, 109
    %v981 = vpop.permute.xlu0 %980
    %982 = vrot.lane.b32.xlu0 %v976, 109
    %v983 = vpop.permute.xlu0 %982
    %v984 = vsel %vm326, %v979, %v981
    %v985 = vsel %vm326, %v981, %v983
    %v987 = vsel %vm34, %v968, 0
    %v990 = vsel %vm38, %v984, 0
    %v993 = vsel %vm38, %v985, 0
    %v996 = vsel %vm38, %v983, 0
    %998 = vmatpush.bf16.msra.mxu0 0
    %999 = vmatpush.bf16.msra.mxu0 0
    %1000 = vmatpush.bf16.msra.mxu0 0
    %1001 = vmatpush.bf16.msra.mxu0 0
    %1002 = vmatpush.bf16.msra.mxu0 0
    %1003 = vmatpush.bf16.msra.mxu0 0
    %1004 = vmatpush.bf16.msra.mxu0 0
    %1005 = vmatpush.bf16.msra.mxu0 %v990
    %1006 = vmatmul.bf16.gmra.mxu0 %v987
    %v1007 = vpop.f32.mrf.mxu0
    %v1008 = vadd.f32 0.0, %v1007
    %v1009 = vpop.f32.mrf.mxu0
    %1010 = vdwg.mxu0
    %1011 = vmatpush.bf16.msra.mxu0 0
    %1012 = vmatpush.bf16.msra.mxu0 0
    %1013 = vmatpush.bf16.msra.mxu0 0
    %1014 = vmatpush.bf16.msra.mxu0 0
    %1015 = vmatpush.bf16.msra.mxu0 0
    %1016 = vmatpush.bf16.msra.mxu0 0
    %1017 = vmatpush.bf16.msra.mxu0 0
    %1018 = vmatpush.bf16.msra.mxu0 %v993
    %1019 = vmatmul.bf16.gmra.mxu0 %v987
    %v1020 = vpop.f32.mrf.mxu0
    %v1021 = vadd.f32 0.0, %v1020
    %v1022 = vpop.f32.mrf.mxu0
    %1023 = vdwg.mxu0
    %1024 = vmatpush.bf16.msra.mxu0 0
    %1025 = vmatpush.bf16.msra.mxu0 0
    %1026 = vmatpush.bf16.msra.mxu0 0
    %1027 = vmatpush.bf16.msra.mxu0 0
    %1028 = vmatpush.bf16.msra.mxu0 0
    %1029 = vmatpush.bf16.msra.mxu0 0
    %1030 = vmatpush.bf16.msra.mxu0 0
    %1031 = vmatpush.bf16.msra.mxu0 %v996
    %1032 = vmatmul.bf16.gmra.mxu0 %v987
    %v1033 = vpop.f32.mrf.mxu0
    %v1034 = vadd.f32 0.0, %v1033
    %v1035 = vpop.f32.mrf.mxu0
    %1036 = vdwg.mxu0
    %v1037 = vadd.f32 %v965, %v1008
    %v1038 = vadd.f32 %v966, %v1021
    %v1039 = vadd.f32 %v967, %v1034
    %v1040 = vld [vmem:[%s383] sm:$0xf]
    %v1041 = vld [vmem:[%s694] sm:$0x3f]
    %1043 = vst [vmem:[#allocation1] ss:$4 sm:$0xff] %v1041
    %v1044 = vld.sshfl [vmem:[#allocation1] sm:$0xff pattern:$0x73625140]
    %v1046 = vld.sshfl [vmem:[#allocation1 + $0x8] sm:$0xff pattern:$0x73625140]
    %v1048 = vld.sshfl [vmem:[#allocation1 + $0x10] sm:$0xff pattern:$0x73625140]
    %1050 = vrot.lane.b32.xlu0 %v1044, 108
    %v1051 = vpop.permute.xlu0 %1050
    %1052 = vrot.lane.b32.xlu0 %v1046, 108
    %v1053 = vpop.permute.xlu0 %1052
    %1054 = vrot.lane.b32.xlu0 %v1048, 108
    %v1055 = vpop.permute.xlu0 %1054
    %v1056 = vsel %vm400, %v1051, %v1053
    %v1057 = vsel %vm400, %v1053, %v1055
    %v1059 = vsel %vm34, %v1040, 0
    %v1062 = vsel %vm38, %v1056, 0
    %v1065 = vsel %vm38, %v1057, 0
    %v1068 = vsel %vm38, %v1055, 0
    %1070 = vmatpush.bf16.msra.mxu0 0
    %1071 = vmatpush.bf16.msra.mxu0 0
    %1072 = vmatpush.bf16.msra.mxu0 0
    %1073 = vmatpush.bf16.msra.mxu0 0
    %1074 = vmatpush.bf16.msra.mxu0 0
    %1075 = vmatpush.bf16.msra.mxu0 0
    %1076 = vmatpush.bf16.msra.mxu0 0
    %1077 = vmatpush.bf16.msra.mxu0 %v1062
    %1078 = vmatmul.bf16.gmra.mxu0 %v1059
    %v1079 = vpop.f32.mrf.mxu0
    %v1080 = vadd.f32 0.0, %v1079
    %v1081 = vpop.f32.mrf.mxu0
    %1082 = vdwg.mxu0
    %1083 = vmatpush.bf16.msra.mxu0 0
    %1084 = vmatpush.bf16.msra.mxu0 0
    %1085 = vmatpush.bf16.msra.mxu0 0
    %1086 = vmatpush.bf16.msra.mxu0 0
    %1087 = vmatpush.bf16.msra.mxu0 0
    %1088 = vmatpush.bf16.msra.mxu0 0
    %1089 = vmatpush.bf16.msra.mxu0 0
    %1090 = vmatpush.bf16.msra.mxu0 %v1065
    %1091 = vmatmul.bf16.gmra.mxu0 %v1059
    %v1092 = vpop.f32.mrf.mxu0
    %v1093 = vadd.f32 0.0, %v1092
    %v1094 = vpop.f32.mrf.mxu0
    %1095 = vdwg.mxu0
    %1096 = vmatpush.bf16.msra.mxu0 0
    %1097 = vmatpush.bf16.msra.mxu0 0
    %1098 = vmatpush.bf16.msra.mxu0 0
    %1099 = vmatpush.bf16.msra.mxu0 0
    %1100 = vmatpush.bf16.msra.mxu0 0
    %1101 = vmatpush.bf16.msra.mxu0 0
    %1102 = vmatpush.bf16.msra.mxu0 0
    %1103 = vmatpush.bf16.msra.mxu0 %v1068
    %1104 = vmatmul.bf16.gmra.mxu0 %v1059
    %v1105 = vpop.f32.mrf.mxu0
    %v1106 = vadd.f32 0.0, %v1105
    %v1107 = vpop.f32.mrf.mxu0
    %1108 = vdwg.mxu0
    %v1109 = vadd.f32 %v1037, %v1080
    %v1110 = vadd.f32 %v1038, %v1093
    %v1111 = vadd.f32 %v1039, %v1106
    %v1112 = vld [vmem:[%s457] sm:$0xf]
    %v1113 = vld [vmem:[%s694] sm:$0x3f]
    %1115 = vst [vmem:[#allocation1] ss:$4 sm:$0xff] %v1113
    %v1116 = vld.sshfl [vmem:[#allocation1] sm:$0xff pattern:$0x73625140]
    %v1118 = vld.sshfl [vmem:[#allocation1 + $0x8] sm:$0xff pattern:$0x73625140]
    %v1120 = vld.sshfl [vmem:[#allocation1 + $0x10] sm:$0xff pattern:$0x73625140]
    %1122 = vrot.lane.b32.xlu0 %v1116, 92
    %v1123 = vpop.permute.xlu0 %1122
    %1124 = vrot.lane.b32.xlu0 %v1118, 92
    %v1125 = vpop.permute.xlu0 %1124
    %1126 = vrot.lane.b32.xlu0 %v1120, 92
    %v1127 = vpop.permute.xlu0 %1126
    %v1128 = vsel %vm474, %v1123, %v1125
    %v1129 = vsel %vm474, %v1125, %v1127
    %v1131 = vsel %vm34, %v1112, 0
    %v1134 = vsel %vm38, %v1128, 0
    %v1137 = vsel %vm38, %v1129, 0
    %v1140 = vsel %vm38, %v1127, 0
    %1142 = vmatpush.bf16.msra.mxu0 0
    %1143 = vmatpush.bf16.msra.mxu0 0
    %1144 = vmatpush.bf16.msra.mxu0 0
    %1145 = vmatpush.bf16.msra.mxu0 0
    %1146 = vmatpush.bf16.msra.mxu0 0
    %1147 = vmatpush.bf16.msra.mxu0 0
    %1148 = vmatpush.bf16.msra.mxu0 0
    %1149 = vmatpush.bf16.msra.mxu0 %v1134
    %1150 = vmatmul.bf16.gmra.mxu0 %v1131
    %v1151 = vpop.f32.mrf.mxu0
    %v1152 = vadd.f32 0.0, %v1151
    %v1153 = vpop.f32.mrf.mxu0
    %1154 = vdwg.mxu0
    %1155 = vmatpush.bf16.msra.mxu0 0
    %1156 = vmatpush.bf16.msra.mxu0 0
    %1157 = vmatpush.bf16.msra.mxu0 0
    %1158 = vmatpush.bf16.msra.mxu0 0
    %1159 = vmatpush.bf16.msra.mxu0 0
    %1160 = vmatpush.bf16.msra.mxu0 0
    %1161 = vmatpush.bf16.msra.mxu0 0
    %1162 = vmatpush.bf16.msra.mxu0 %v1137
    %1163 = vmatmul.bf16.gmra.mxu0 %v1131
    %v1164 = vpop.f32.mrf.mxu0
    %v1165 = vadd.f32 0.0, %v1164
    %v1166 = vpop.f32.mrf.mxu0
    %1167 = vdwg.mxu0
    %1168 = vmatpush.bf16.msra.mxu0 0
    %1169 = vmatpush.bf16.msra.mxu0 0
    %1170 = vmatpush.bf16.msra.mxu0 0
    %1171 = vmatpush.bf16.msra.mxu0 0
    %1172 = vmatpush.bf16.msra.mxu0 0
    %1173 = vmatpush.bf16.msra.mxu0 0
    %1174 = vmatpush.bf16.msra.mxu0 0
    %1175 = vmatpush.bf16.msra.mxu0 %v1140
    %1176 = vmatmul.bf16.gmra.mxu0 %v1131
    %v1177 = vpop.f32.mrf.mxu0
    %v1178 = vadd.f32 0.0, %v1177
    %v1179 = vpop.f32.mrf.mxu0
    %1180 = vdwg.mxu0
    %v1181 = vadd.f32 %v1109, %v1152
    %v1182 = vadd.f32 %v1110, %v1165
    %v1183 = vadd.f32 %v1111, %v1178
    %v1184 = vld [vmem:[%s531] sm:$0xf]
    %v1185 = vld [vmem:[%s694] sm:$0x3f]
    %1187 = vst [vmem:[#allocation1] ss:$4 sm:$0xff] %v1185
    %v1188 = vld.sshfl [vmem:[#allocation1] sm:$0xff pattern:$0x73625140]
    %v1190 = vld.sshfl [vmem:[#allocation1 + $0x8] sm:$0xff pattern:$0x73625140]
    %v1192 = vld.sshfl [vmem:[#allocation1 + $0x10] sm:$0xff pattern:$0x73625140]
    %1194 = vrot.lane.b32.xlu0 %v1188, 91
    %v1195 = vpop.permute.xlu0 %1194
    %1196 = vrot.lane.b32.xlu0 %v1190, 91
    %v1197 = vpop.permute.xlu0 %1196
    %1198 = vrot.lane.b32.xlu0 %v1192, 91
    %v1199 = vpop.permute.xlu0 %1198
    %v1200 = vsel %vm548, %v1195, %v1197
    %v1201 = vsel %vm548, %v1197, %v1199
    %v1203 = vsel %vm34, %v1184, 0
    %v1206 = vsel %vm38, %v1200, 0
    %v1209 = vsel %vm38, %v1201, 0
    %v1212 = vsel %vm38, %v1199, 0
    %1214 = vmatpush.bf16.msra.mxu0 0
    %1215 = vmatpush.bf16.msra.mxu0 0
    %1216 = vmatpush.bf16.msra.mxu0 0
    %1217 = vmatpush.bf16.msra.mxu0 0
    %1218 = vmatpush.bf16.msra.mxu0 0
    %1219 = vmatpush.bf16.msra.mxu0 0
    %1220 = vmatpush.bf16.msra.mxu0 0
    %1221 = vmatpush.bf16.msra.mxu0 %v1206
    %1222 = vmatmul.bf16.gmra.mxu0 %v1203
    %v1223 = vpop.f32.mrf.mxu0
    %v1224 = vadd.f32 0.0, %v1223
    %v1225 = vpop.f32.mrf.mxu0
    %1226 = vdwg.mxu0
    %1227 = vmatpush.bf16.msra.mxu0 0
    %1228 = vmatpush.bf16.msra.mxu0 0
    %1229 = vmatpush.bf16.msra.mxu0 0
    %1230 = vmatpush.bf16.msra.mxu0 0
    %1231 = vmatpush.bf16.msra.mxu0 0
    %1232 = vmatpush.bf16.msra.mxu0 0
    %1233 = vmatpush.bf16.msra.mxu0 0
    %1234 = vmatpush.bf16.msra.mxu0 %v1209
    %1235 = vmatmul.bf16.gmra.mxu0 %v1203
    %v1236 = vpop.f32.mrf.mxu0
    %v1237 = vadd.f32 0.0, %v1236
    %v1238 = vpop.f32.mrf.mxu0
    %1239 = vdwg.mxu0
    %1240 = vmatpush.bf16.msra.mxu0 0
    %1241 = vmatpush.bf16.msra.mxu0 0
    %1242 = vmatpush.bf16.msra.mxu0 0
    %1243 = vmatpush.bf16.msra.mxu0 0
    %1244 = vmatpush.bf16.msra.mxu0 0
    %1245 = vmatpush.bf16.msra.mxu0 0
    %1246 = vmatpush.bf16.msra.mxu0 0
    %1247 = vmatpush.bf16.msra.mxu0 %v1212
    %1248 = vmatmul.bf16.gmra.mxu0 %v1203
    %v1249 = vpop.f32.mrf.mxu0
    %v1250 = vadd.f32 0.0, %v1249
    %v1251 = vpop.f32.mrf.mxu0
    %1252 = vdwg.mxu0
    %v1253 = vadd.f32 %v1181, %v1224
    %v1254 = vadd.f32 %v1182, %v1237
    %v1255 = vadd.f32 %v1183, %v1250
    %v1256 = vld [vmem:[%s605] sm:$0xf]
    %v1257 = vld [vmem:[%s694] sm:$0x3f]
    %1259 = vst [vmem:[#allocation1] ss:$4 sm:$0xff] %v1257
    %v1260 = vld.sshfl [vmem:[#allocation1] sm:$0xff pattern:$0x73625140]
    %v1262 = vld.sshfl [vmem:[#allocation1 + $0x8] sm:$0xff pattern:$0x73625140]
    %v1264 = vld.sshfl [vmem:[#allocation1 + $0x10] sm:$0xff pattern:$0x73625140]
    %1266 = vrot.lane.b32.xlu0 %v1260, 90
    %v1267 = vpop.permute.xlu0 %1266
    %1268 = vrot.lane.b32.xlu0 %v1262, 90
    %v1269 = vpop.permute.xlu0 %1268
    %1270 = vrot.lane.b32.xlu0 %v1264, 90
    %v1271 = vpop.permute.xlu0 %1270
    %v1272 = vsel %vm622, %v1267, %v1269
    %v1273 = vsel %vm622, %v1269, %v1271
    %v1275 = vsel %vm34, %v1256, 0
    %v1278 = vsel %vm38, %v1272, 0
    %v1281 = vsel %vm38, %v1273, 0
    %v1284 = vsel %vm38, %v1271, 0
    %1286 = vmatpush.bf16.msra.mxu0 0
    %1287 = vmatpush.bf16.msra.mxu0 0
    %1288 = vmatpush.bf16.msra.mxu0 0
    %1289 = vmatpush.bf16.msra.mxu0 0
    %1290 = vmatpush.bf16.msra.mxu0 0
    %1291 = vmatpush.bf16.msra.mxu0 0
    %1292 = vmatpush.bf16.msra.mxu0 0
    %1293 = vmatpush.bf16.msra.mxu0 %v1278
    %1294 = vmatmul.bf16.gmra.mxu0 %v1275
    %v1295 = vpop.f32.mrf.mxu0
    %v1296 = vadd.f32 0.0, %v1295
    %v1297 = vpop.f32.mrf.mxu0
    %1298 = vdwg.mxu0
    %1299 = vmatpush.bf16.msra.mxu0 0
    %1300 = vmatpush.bf16.msra.mxu0 0
    %1301 = vmatpush.bf16.msra.mxu0 0
    %1302 = vmatpush.bf16.msra.mxu0 0
    %1303 = vmatpush.bf16.msra.mxu0 0
    %1304 = vmatpush.bf16.msra.mxu0 0
    %1305 = vmatpush.bf16.msra.mxu0 0
    %1306 = vmatpush.bf16.msra.mxu0 %v1281
    %1307 = vmatmul.bf16.gmra.mxu0 %v1275
    %v1308 = vpop.f32.mrf.mxu0
    %v1309 = vadd.f32 0.0, %v1308
    %v1310 = vpop.f32.mrf.mxu0
    %1311 = vdwg.mxu0
    %1312 = vmatpush.bf16.msra.mxu0 0
    %1313 = vmatpush.bf16.msra.mxu0 0
    %1314 = vmatpush.bf16.msra.mxu0 0
    %1315 = vmatpush.bf16.msra.mxu0 0
    %1316 = vmatpush.bf16.msra.mxu0 0
    %1317 = vmatpush.bf16.msra.mxu0 0
    %1318 = vmatpush.bf16.msra.mxu0 0
    %1319 = vmatpush.bf16.msra.mxu0 %v1284
    %1320 = vmatmul.bf16.gmra.mxu0 %v1275
    %v1321 = vpop.f32.mrf.mxu0
    %v1322 = vadd.f32 0.0, %v1321
    %v1323 = vpop.f32.mrf.mxu0
    %1324 = vdwg.mxu0
    %v1325 = vadd.f32 %v1253, %v1296
    %v1326 = vadd.f32 %v1254, %v1309
    %v1327 = vadd.f32 %v1255, %v1322
    %vm1328 = vcmp.ge.f32.partialorder %v1325, 0.0
    %vm1329 = vcmp.ge.f32.partialorder %v1326, 0.0
    %vm1330 = vcmp.ge.f32.partialorder %v1327, 0.0
    %v1331 = vmul.f32 %v682, %v1325
    %v1332 = vmul.f32 %v682, %v1326
    %v1333 = vmul.f32 %v682, %v1327
    %v1334 = vsel %vm1328, %v1325, %v1331
    %v1335 = vsel %vm1329, %v1326, %v1332
    %v1336 = vsel %vm1330, %v1327, %v1333
    %s1337 = scalar_lea.vmem [#allocation3], 24
    %1338 = vst [vmem:[%s1337] sm:$0xff] %v1334
    %1339 = vst [vmem:[%s1337 + $0x8] sm:$0xff] %v1335
    %1340 = vst.msk [vmem:[%s1337 + $0x10] sm:$0xff] %vm691, %v1336
    // Predicated region
    $region18: #{tpu_custom_call.1} parent=1 // pred_check
      _
    $region19: #{tpu_custom_call.1} parent=1 // pred_check_branch
      %1342 = sbr.rel (0) target = $region21
    $region20: #{tpu_custom_call.1} parent=1 // pred_region
      %1344 = vsyncadd [#allocation4], 0
      %s1345 = sshll.u32 [#allocation3], 4
      %s1346 = int_to_ptr.vmem [resolvable:$true] %s1345
      %s1347 = sshll.u32 %s4, 4
      %s1348 = int_to_ptr.hbm [resolvable:$true] %s1347
      %1353 = dma.vmem_to_hbm [thread:$0]  %s1346, 768, %s1348, [#allocation4], 384, 384, 24
    $region21: #{tpu_custom_call.1} parent=1 // pred_fallthru
      _
    // Predicated region
    $region22: #{tpu_custom_call.1} parent=1 // pred_check
      _
    $region23: #{tpu_custom_call.1} parent=1 // pred_check_branch
      %1355 = sbr.rel (0) target = $region25
    $region24: #{tpu_custom_call.1} parent=1 // pred_region
      %1357 = dma.done [#allocation4], 768
    $region25: #{tpu_custom_call.1} parent=1 // pred_fallthru
      _
    %1358 = vsyncpa [#allocation4], 1

</llo_original>
